<compile_context>
chip_gen: v6e
topology: v6e:2x2x1
jax: 0.10.0
libtpu: 0.0.40
codegen_flags: <defaults>
</compile_context>

<pallas_src>
import functools

import jax
import jax.numpy as jnp
from jax.experimental import pallas as pl
from jax.experimental.pallas import tpu as pltpu


def _conv_bias_stats_kernel(x_ref, w_ref, b_ref, y_ref, stats_ref, *,
                            K, stride, tile_h, Wo, Cout_pad):
    """Conv2d (single im2col matmul) + bias + per-image BN partial stats.

    x_ref:     (1, Hp, Wp, Cin)          zero-padded input image (mxu dtype)
    w_ref:     (K*K*Cin, Cout_pad)       im2col weight, zero-padded to 128 lanes
    b_ref:     (1, Cout_pad)             f32 bias, zero-padded
    y_ref:     (1, tile_h*Wo, Cout_pad)  conv+bias output tile, lane-dense
    stats_ref: (1, 2, Cout_pad)          f32 per-image [sum, sum_sq] accumulator
    """
    hb = pl.program_id(1)
    rows_in = (tile_h - 1) * stride + K
    row0 = hb * (tile_h * stride)
    if (tile_h * stride) % 8 == 0:
        row0 = pl.multiple_of(row0, 8)          # aligned sublane loads

    # Only the padded-input rows this output tile needs (H is a major dim, so
    # the dynamic start is just an address offset).
    xs = x_ref[0, pl.ds(row0, rows_in), :, :]                # (rows_in, Wp, Cin)

    # im2col: build the (tile_h, Wo, K*K*Cin) patch, then ONE MXU matmul with
    # contraction K*K*Cin.
    # TODO(synk): for production image sizes, flatten x to (N, Hp, Wp*Cin)
    # (lane-dense DMA) with halo'd row blocks and generate the kw shifts with
    # pltpu.roll feeding accumulating dots, so the lane-sparse (Wp, Cin) block
    # padding never threatens the v7x 64 MiB VMEM budget; at this size the
    # padded block is ~0.2 MiB, so the known-good 4-D layout is kept.
    cols = []
    for kh in range(K):                                      # K*K small & static
        for kw in range(K):
            cols.append(xs[kh:kh + (tile_h - 1) * stride + 1:stride,
                           kw:kw + (Wo - 1) * stride + 1:stride, :])
    patch = jnp.concatenate(cols, axis=-1)                   # (tile_h, Wo, K*K*Cin)
    patch = patch.reshape(tile_h * Wo, patch.shape[-1])

    # Cout padded to 128 lanes -> acc is already lane-dense; no relayout before
    # the store, and the stats sums below are full-lane as well.
    acc = jnp.dot(patch, w_ref[...],
                  preferred_element_type=jnp.float32)        # (tile_h*Wo, 128) f32
    acc = acc + b_ref[...]                                   # conv bias (f32)

    y_ref[0] = acc.astype(y_ref.dtype)                       # unmasked vst

    # Per-image BatchNorm partial statistics, accumulated in the resident
    # stats output block across the innermost ("arbitrary") hb axis.
    @pl.when(hb == 0)
    def _():
        stats_ref[...] = jnp.zeros_like(stats_ref)

    psum = jnp.sum(acc, axis=0, keepdims=True)               # (1, 128)
    psq = jnp.sum(acc * acc, axis=0, keepdims=True)          # (1, 128)
    stats_ref[0] += jnp.concatenate([psum, psq], axis=0)     # (2, 128)


def _bn_relu_kernel(y_ref, scale_ref, shift_ref, o_ref):
    """y * (gamma/std) + (beta - mean*gamma/std), then ReLU.  All lane-dense."""
    y = y_ref[0].astype(jnp.float32)                         # (rows, 128)
    o_ref[0] = jnp.maximum(y * scale_ref[...] + shift_ref[...], 0.0
                           ).astype(o_ref.dtype)


def _largest_divisor(total, target, *, unit=1):
    """Largest d dividing `total` with d*unit <= target and (d*unit) % 8 == 0
    (d == total is exempt: a block equal to the full dim is always legal)."""
    cands = [d for d in range(1, total + 1)
             if total % d == 0 and d * unit <= target
             and ((d * unit) % 8 == 0 or d == total)]
    return max(cands) if cands else total


def conv2d_batchnorm_relu(x_nchw, w_oihw, bias, gamma, beta, *,
                          stride, padding, eps=1e-5, mxu_dtype=jnp.bfloat16):
    N, Cin, H, W = x_nchw.shape
    Cout, _, K, _ = w_oihw.shape
    Ho = (H + 2 * padding - K) // stride + 1
    Wo = (W + 2 * padding - K) // stride + 1
    Hp, Wp = H + 2 * padding, W + 2 * padding

    LANES = 128
    Cout_pad = ((Cout + LANES - 1) // LANES) * LANES
    # Intermediate conv+bias tensor: bf16 on the bf16 path (halves the HBM
    # write + re-read), f32 otherwise.  Accumulator / stats / scale stay f32.
    inter_dtype = (jnp.bfloat16
                   if jnp.dtype(mxu_dtype) == jnp.dtype(jnp.bfloat16)
                   else jnp.float32)

    # Spatial tiling: target ~512 lane-dense output rows per grid step.
    # TODO(synk): masked tail handling instead of the tile_h = Ho fallback for
    # awkward (prime) heights at large image sizes.
    tile_h = _largest_divisor(Ho, 512, unit=Wo)
    num_hb = Ho // tile_h
    tile_rows = tile_h * Wo

    # ---- glue: layout conversion, spatial zero-pad, padded im2col weight -----
    x = jnp.transpose(x_nchw, (0, 2, 3, 1)).astype(mxu_dtype)        # NCHW->NHWC
    x = jnp.pad(x, ((0, 0), (padding, padding), (padding, padding), (0, 0)))
    w2 = jnp.transpose(w_oihw, (2, 3, 1, 0)).reshape(K * K * Cin, Cout)
    w2 = jnp.pad(w2, ((0, 0), (0, Cout_pad - Cout))).astype(mxu_dtype)
    b2 = jnp.pad(bias.astype(jnp.float32),
                 (0, Cout_pad - Cout)).reshape(1, Cout_pad)

    # ---- Kernel 1: conv + bias + per-image BN partial stats -------------------
    # TODO(synk): add a Cout grid axis tiled to 128/256 lanes (and raise
    # vmem_limit_bytes) once channel counts / image sizes grow; at this size a
    # single 128-lane padded output tile is the whole channel extent.
    y_flat, stats = pl.pallas_call(
        functools.partial(_conv_bias_stats_kernel, K=K, stride=stride,
                          tile_h=tile_h, Wo=Wo, Cout_pad=Cout_pad),
        out_shape=(
            jax.ShapeDtypeStruct((N, Ho * Wo, Cout_pad), inter_dtype),
            jax.ShapeDtypeStruct((N, 2, Cout_pad), jnp.float32),
        ),
        grid_spec=pltpu.PrefetchScalarGridSpec(
            num_scalar_prefetch=0,
            grid=(N, num_hb),
            in_specs=[
                pl.BlockSpec((1, Hp, Wp, Cin), lambda n, hb: (n, 0, 0, 0)),
                pl.BlockSpec((K * K * Cin, Cout_pad), lambda n, hb: (0, 0)),
                pl.BlockSpec((1, Cout_pad), lambda n, hb: (0, 0)),
            ],
            out_specs=[
                pl.BlockSpec((1, tile_rows, Cout_pad), lambda n, hb: (n, hb, 0)),
                pl.BlockSpec((1, 2, Cout_pad), lambda n, hb: (n, 0, 0)),
            ],
        ),
        compiler_params=pltpu.CompilerParams(
            dimension_semantics=("parallel", "arbitrary")),
    )(x, w2, b2)

    # ---- glue: finish BN batch statistics, fold gamma/beta/eps ----------------
    count = N * Ho * Wo
    total = jnp.sum(stats, axis=0)                           # (2, Cout_pad)
    mean = total[0] / count
    var = jnp.maximum(total[1] / count - mean * mean, 0.0)   # clamped one-pass var
    gamma_p = jnp.pad(gamma.astype(jnp.float32), (0, Cout_pad - Cout))
    beta_p = jnp.pad(beta.astype(jnp.float32), (0, Cout_pad - Cout))
    scale = gamma_p * jax.lax.rsqrt(var + eps)
    shift = beta_p - mean * scale
    scale2 = scale.reshape(1, Cout_pad)
    shift2 = shift.reshape(1, Cout_pad)
    # TODO(synk): BatchNorm2d running_mean/running_var buffer updates (training
    # side effect) are not emitted; the forward output does not depend on them.

    # ---- Kernel 2: normalize + ReLU with big lane-dense blocks ----------------
    rows2 = _largest_divisor(Ho * Wo, 2048, unit=1)          # whole image here
    num_rb = (Ho * Wo) // rows2
    out_flat = pl.pallas_call(
        _bn_relu_kernel,
        out_shape=jax.ShapeDtypeStruct((N, Ho * Wo, Cout_pad), jnp.float32),
        grid_spec=pltpu.PrefetchScalarGridSpec(
            num_scalar_prefetch=0,
            grid=(N, num_rb),
            in_specs=[
                pl.BlockSpec((1, rows2, Cout_pad), lambda n, rb: (n, rb, 0)),
                pl.BlockSpec((1, Cout_pad), lambda n, rb: (0, 0)),
                pl.BlockSpec((1, Cout_pad), lambda n, rb: (0, 0)),
            ],
            out_specs=pl.BlockSpec((1, rows2, Cout_pad),
                                   lambda n, rb: (n, rb, 0)),
        ),
        compiler_params=pltpu.CompilerParams(
            dimension_semantics=("parallel", "parallel")),
    )(y_flat, scale2, shift2)

    out_nhwc = out_flat.reshape(N, Ho, Wo, Cout_pad)[..., :Cout]
    return jnp.transpose(out_nhwc, (0, 3, 1, 2))             # NHWC -> NCHW


def _reference(x_nchw, w_oihw, bias, gamma, beta, *, stride, padding, eps=1e-5):
    y = jax.lax.conv_general_dilated(
        x_nchw, w_oihw, window_strides=(stride, stride),
        padding=[(padding, padding), (padding, padding)],
        dimension_numbers=("NCHW", "OIHW", "NCHW"))
    y = y + bias[None, :, None, None]
    mean = jnp.mean(y, axis=(0, 2, 3), keepdims=True)
    var = jnp.mean((y - mean) ** 2, axis=(0, 2, 3), keepdims=True)
    y = (y - mean) * jax.lax.rsqrt(var + eps)
    y = y * gamma[None, :, None, None] + beta[None, :, None, None]
    return jnp.maximum(y, 0.0)


if __name__ == "__main__":
    # conv2DBatchNormRelu(in_channels=4, n_filters=8, k_size=3, stride=1,
    #                     padding=1, bias=True)
    N, Cin, H, W = 2, 4, 16, 16
    Cout, K, stride, padding = 8, 3, 1, 1

    key = jax.random.PRNGKey(0)
    k1, k2, k3 = jax.random.split(key, 3)
    x = jax.random.normal(k1, (N, Cin, H, W), jnp.float32)
    w = jax.random.normal(k2, (Cout, Cin, K, K), jnp.float32) * 0.1
    b = jax.random.normal(k3, (Cout,), jnp.float32) * 0.1
    gamma = jnp.ones((Cout,), jnp.float32)    # BatchNorm2d default weight init
    beta = jnp.zeros((Cout,), jnp.float32)    # BatchNorm2d default bias init

    ref = _reference(x, w, b, gamma, beta, stride=stride, padding=padding)

    cbr = jax.jit(conv2d_batchnorm_relu,
                  static_argnames=("stride", "padding", "eps", "mxu_dtype"))

    # Exact path: f32 MXU inputs and f32 intermediate — tight tolerance.
    out = jax.block_until_ready(
        cbr(x, w, b, gamma, beta, stride=stride, padding=padding,
            mxu_dtype=jnp.float32))
    assert out.shape == (N, Cout, H, W)
    err = float(jnp.max(jnp.abs(out - ref)))
    assert jnp.allclose(out, ref, atol=1e-3, rtol=1e-3), err

    # Default path: bf16 MXU inputs + bf16 intermediate, f32 accumulation and
    # exact BN statistics — checked at a looser tolerance.
    out_bf16 = jax.block_until_ready(
        cbr(x, w, b, gamma, beta, stride=stride, padding=padding))
    err_bf16 = float(jnp.max(jnp.abs(out_bf16 - ref)))
    assert jnp.allclose(out_bf16, ref, atol=5e-2, rtol=5e-2), err_bf16

    print("KERNEL_OK")
</pallas_src>

<mosaic_0001>
module attributes {stable_mosaic.version = 11 : i64} {
  func.func @_conv_bias_stats_kernel(%arg0: i32, %arg1: i32, %arg2: memref<1x18x18x4xf32, #tpu.memory_space<vmem>>, %arg3: memref<36x128xf32, #tpu.memory_space<vmem>>, %arg4: memref<1x128xf32, #tpu.memory_space<vmem>>, %arg5: memref<1x256x128xf32, #tpu.memory_space<vmem>>, %arg6: memref<1x2x128xf32, #tpu.memory_space<vmem>>) attributes {dimension_semantics = [#tpu.dimension_semantics<parallel>, #tpu.dimension_semantics<arbitrary>], iteration_bounds = array<i64: 2, 1>, scalar_prefetch = 0 : i64, scratch_operands = 0 : i64, tpu.core_type = #tpu.core_type<tc>, window_params = [{transform_indices = @transform_0, window_bounds = array<i64: 1, 18, 18, 4>}, {pipeline_mode = #tpu.pipeline_mode<synchronous>, transform_indices = @transform_1, window_bounds = array<i64: 36, 128>}, {pipeline_mode = #tpu.pipeline_mode<synchronous>, transform_indices = @transform_2, window_bounds = array<i64: 1, 128>}, {transform_indices = @transform_3, window_bounds = array<i64: 1, 256, 128>}, {transform_indices = @transform_4, window_bounds = array<i64: 1, 2, 128>}]} {
    %c16_i32 = arith.constant 16 : i32
    %0 = arith.muli %arg1, %c16_i32 : i32
    %1 = tpu.assume_multiple %0, 8 : i32
    %c0 = arith.constant 0 : index
    %2 = arith.index_cast %1 : i32 to index
    %c0_0 = arith.constant 0 : index
    %c0_1 = arith.constant 0 : index
    %3 = vector.load %arg2[%c0, %2, %c0_0, %c0_1] : memref<1x18x18x4xf32, #tpu.memory_space<vmem>>, vector<1x18x18x4xf32>
    %4 = vector.shape_cast %3 : vector<1x18x18x4xf32> to vector<18x18x4xf32>
    %5 = vector.extract_strided_slice %4 {offsets = [0, 0, 0], sizes = [16, 16, 4], strides = [1, 1, 1]} : vector<18x18x4xf32> to vector<16x16x4xf32>
    %6 = vector.extract_strided_slice %4 {offsets = [0, 1, 0], sizes = [16, 16, 4], strides = [1, 1, 1]} : vector<18x18x4xf32> to vector<16x16x4xf32>
    %7 = vector.extract_strided_slice %4 {offsets = [0, 2, 0], sizes = [16, 16, 4], strides = [1, 1, 1]} : vector<18x18x4xf32> to vector<16x16x4xf32>
    %8 = vector.extract_strided_slice %4 {offsets = [1, 0, 0], sizes = [16, 16, 4], strides = [1, 1, 1]} : vector<18x18x4xf32> to vector<16x16x4xf32>
    %9 = vector.extract_strided_slice %4 {offsets = [1, 1, 0], sizes = [16, 16, 4], strides = [1, 1, 1]} : vector<18x18x4xf32> to vector<16x16x4xf32>
    %10 = vector.extract_strided_slice %4 {offsets = [1, 2, 0], sizes = [16, 16, 4], strides = [1, 1, 1]} : vector<18x18x4xf32> to vector<16x16x4xf32>
    %11 = vector.extract_strided_slice %4 {offsets = [2, 0, 0], sizes = [16, 16, 4], strides = [1, 1, 1]} : vector<18x18x4xf32> to vector<16x16x4xf32>
    %12 = vector.extract_strided_slice %4 {offsets = [2, 1, 0], sizes = [16, 16, 4], strides = [1, 1, 1]} : vector<18x18x4xf32> to vector<16x16x4xf32>
    %13 = vector.extract_strided_slice %4 {offsets = [2, 2, 0], sizes = [16, 16, 4], strides = [1, 1, 1]} : vector<18x18x4xf32> to vector<16x16x4xf32>
    %14 = tpu.concatenate %5, %6, %7, %8, %9, %10, %11, %12, %13 in 2 : vector<16x16x4xf32>, vector<16x16x4xf32>, vector<16x16x4xf32>, vector<16x16x4xf32>, vector<16x16x4xf32>, vector<16x16x4xf32>, vector<16x16x4xf32>, vector<16x16x4xf32>, vector<16x16x4xf32> -> vector<16x16x36xf32>
    %15 = vector.shape_cast %14 : vector<16x16x36xf32> to vector<256x36xf32>
    %c0_2 = arith.constant 0 : index
    %c0_3 = arith.constant 0 : index
    %16 = vector.load %arg3[%c0_2, %c0_3] : memref<36x128xf32, #tpu.memory_space<vmem>>, vector<36x128xf32>
    %cst = arith.constant dense<0.000000e+00> : vector<256x128xf32>
    %17 = tpu.matmul %15, %16, %cst {dimension_numbers = #tpu.dot_dimension_numbers<[1], [0], [0], [1], [0, 0, 1, 1], [], []>} : vector<256x36xf32>, vector<36x128xf32>, vector<256x128xf32> -> vector<256x128xf32>
    %c0_4 = arith.constant 0 : index
    %c0_5 = arith.constant 0 : index
    %18 = vector.load %arg4[%c0_4, %c0_5] : memref<1x128xf32, #tpu.memory_space<vmem>>, vector<1x128xf32>
    %19 = vector.broadcast %18 : vector<1x128xf32> to vector<256x128xf32>
    %20 = arith.addf %17, %19 : vector<256x128xf32>
    %c0_6 = arith.constant 0 : index
    %c0_7 = arith.constant 0 : index
    %c0_8 = arith.constant 0 : index
    %21 = vector.load %arg5[%c0_6, %c0_7, %c0_8] : memref<1x256x128xf32, #tpu.memory_space<vmem>>, vector<1x256x128xf32>
    %22 = vector.shape_cast %21 : vector<1x256x128xf32> to vector<256x128xf32>
    %23 = vector.shape_cast %20 : vector<256x128xf32> to vector<1x256x128xf32>
    tpu.vector_store %arg5[%c0_6, %c0_7, %c0_8], %23 {strides = array<i32>} : memref<1x256x128xf32, #tpu.memory_space<vmem>>, vector<1x256x128xf32>,
    %c0_i32 = arith.constant 0 : i32
    %24 = arith.cmpi eq, %arg1, %c0_i32 : i32
    %25 = arith.extui %24 : i1 to i32
    %c0_i32_9 = arith.constant 0 : i32
    %26 = arith.cmpi ne, %25, %c0_i32_9 : i32
    scf.if %26 {
      %cst_18 = arith.constant 0.000000e+00 : f32
      %39 = vector.broadcast %cst_18 : f32 to vector<1x2x128xf32>
      %c0_19 = arith.constant 0 : index
      %c0_20 = arith.constant 0 : index
      %c0_21 = arith.constant 0 : index
      %40 = vector.load %arg6[%c0_19, %c0_20, %c0_21] : memref<1x2x128xf32, #tpu.memory_space<vmem>>, vector<1x2x128xf32>
      tpu.vector_store %arg6[%c0_19, %c0_20, %c0_21], %39 {strides = array<i32>} : memref<1x2x128xf32, #tpu.memory_space<vmem>>, vector<1x2x128xf32>,
    } else {
    }
    %cst_10 = arith.constant dense<0.000000e+00> : vector<128xf32>
    %27 = vector.multi_reduction <add>, %20, %cst_10 [0] : vector<256x128xf32> to vector<128xf32>
    %28 = vector.shape_cast %27 : vector<128xf32> to vector<1x128xf32>
    %29 = arith.mulf %20, %20 : vector<256x128xf32>
    %cst_11 = arith.constant dense<0.000000e+00> : vector<128xf32>
    %30 = vector.multi_reduction <add>, %29, %cst_11 [0] : vector<256x128xf32> to vector<128xf32>
    %31 = vector.shape_cast %30 : vector<128xf32> to vector<1x128xf32>
    %c0_12 = arith.constant 0 : index
    %c0_13 = arith.constant 0 : index
    %c0_14 = arith.constant 0 : index
    %32 = vector.load %arg6[%c0_12, %c0_13, %c0_14] : memref<1x2x128xf32, #tpu.memory_space<vmem>>, vector<1x2x128xf32>
    %33 = vector.shape_cast %32 : vector<1x2x128xf32> to vector<2x128xf32>
    %34 = tpu.concatenate %28, %31 in 0 : vector<1x128xf32>, vector<1x128xf32> -> vector<2x128xf32>
    %35 = arith.addf %33, %34 : vector<2x128xf32>
    %c0_15 = arith.constant 0 : index
    %c0_16 = arith.constant 0 : index
    %c0_17 = arith.constant 0 : index
    %36 = vector.load %arg6[%c0_15, %c0_16, %c0_17] : memref<1x2x128xf32, #tpu.memory_space<vmem>>, vector<1x2x128xf32>
    %37 = vector.shape_cast %36 : vector<1x2x128xf32> to vector<2x128xf32>
    %38 = vector.shape_cast %35 : vector<2x128xf32> to vector<1x2x128xf32>
    tpu.vector_store %arg6[%c0_15, %c0_16, %c0_17], %38 {strides = array<i32>} : memref<1x2x128xf32, #tpu.memory_space<vmem>>, vector<1x2x128xf32>,
    return
  }
  func.func @transform_0(%arg0: i32, %arg1: i32) -> (i32, i32, i32, i32) {
    %c0_i32 = arith.constant 0 : i32
    %c0_i32_0 = arith.constant 0 : i32
    %c0_i32_1 = arith.constant 0 : i32
    %c0_i32_2 = arith.constant 0 : i32
    return %arg0, %c0_i32, %c0_i32_0, %c0_i32_1 : i32, i32, i32, i32
  }
  func.func @transform_1(%arg0: i32, %arg1: i32) -> (i32, i32) {
    %c0_i32 = arith.constant 0 : i32
    %c0_i32_0 = arith.constant 0 : i32
    %c0_i32_1 = arith.constant 0 : i32
    return %c0_i32, %c0_i32_0 : i32, i32
  }
  func.func @transform_2(%arg0: i32, %arg1: i32) -> (i32, i32) {
    %c0_i32 = arith.constant 0 : i32
    %c0_i32_0 = arith.constant 0 : i32
    %c0_i32_1 = arith.constant 0 : i32
    return %c0_i32, %c0_i32_0 : i32, i32
  }
  func.func @transform_3(%arg0: i32, %arg1: i32) -> (i32, i32, i32) {
    %c0_i32 = arith.constant 0 : i32
    %c0_i32_0 = arith.constant 0 : i32
    return %arg0, %arg1, %c0_i32 : i32, i32, i32
  }
  func.func @transform_4(%arg0: i32, %arg1: i32) -> (i32, i32, i32) {
    %c0_i32 = arith.constant 0 : i32
    %c0_i32_0 = arith.constant 0 : i32
    %c0_i32_1 = arith.constant 0 : i32
    return %arg0, %c0_i32, %c0_i32_0 : i32, i32, i32
  }
}

module attributes {stable_mosaic.version = 11 : i64} {
  func.func @_bn_relu_kernel(%arg0: i32, %arg1: i32, %arg2: memref<1x256x128xf32, #tpu.memory_space<vmem>>, %arg3: memref<1x128xf32, #tpu.memory_space<vmem>>, %arg4: memref<1x128xf32, #tpu.memory_space<vmem>>, %arg5: memref<1x256x128xf32, #tpu.memory_space<vmem>>) attributes {dimension_semantics = [#tpu.dimension_semantics<parallel>, #tpu.dimension_semantics<parallel>], iteration_bounds = array<i64: 2, 1>, scalar_prefetch = 0 : i64, scratch_operands = 0 : i64, tpu.core_type = #tpu.core_type<tc>, window_params = [{transform_indices = @transform_0, window_bounds = array<i64: 1, 256, 128>}, {pipeline_mode = #tpu.pipeline_mode<synchronous>, transform_indices = @transform_1, window_bounds = array<i64: 1, 128>}, {pipeline_mode = #tpu.pipeline_mode<synchronous>, transform_indices = @transform_2, window_bounds = array<i64: 1, 128>}, {transform_indices = @transform_3, window_bounds = array<i64: 1, 256, 128>}]} {
    %c0 = arith.constant 0 : index
    %c0_0 = arith.constant 0 : index
    %c0_1 = arith.constant 0 : index
    %0 = vector.load %arg2[%c0, %c0_0, %c0_1] : memref<1x256x128xf32, #tpu.memory_space<vmem>>, vector<1x256x128xf32>
    %1 = vector.shape_cast %0 : vector<1x256x128xf32> to vector<256x128xf32>
    %c0_2 = arith.constant 0 : index
    %c0_3 = arith.constant 0 : index
    %2 = vector.load %arg3[%c0_2, %c0_3] : memref<1x128xf32, #tpu.memory_space<vmem>>, vector<1x128xf32>
    %3 = vector.broadcast %2 : vector<1x128xf32> to vector<256x128xf32>
    %4 = arith.mulf %1, %3 : vector<256x128xf32>
    %c0_4 = arith.constant 0 : index
    %c0_5 = arith.constant 0 : index
    %5 = vector.load %arg4[%c0_4, %c0_5] : memref<1x128xf32, #tpu.memory_space<vmem>>, vector<1x128xf32>
    %6 = vector.broadcast %5 : vector<1x128xf32> to vector<256x128xf32>
    %7 = arith.addf %4, %6 : vector<256x128xf32>
    %cst = arith.constant 0.000000e+00 : f32
    %8 = vector.broadcast %cst : f32 to vector<256x128xf32>
    %9 = arith.maximumf %7, %8 : vector<256x128xf32>
    %c0_6 = arith.constant 0 : index
    %c0_7 = arith.constant 0 : index
    %c0_8 = arith.constant 0 : index
    %10 = vector.load %arg5[%c0_6, %c0_7, %c0_8] : memref<1x256x128xf32, #tpu.memory_space<vmem>>, vector<1x256x128xf32>
    %11 = vector.shape_cast %10 : vector<1x256x128xf32> to vector<256x128xf32>
    %12 = vector.shape_cast %9 : vector<256x128xf32> to vector<1x256x128xf32>
    tpu.vector_store %arg5[%c0_6, %c0_7, %c0_8], %12 {strides = array<i32>} : memref<1x256x128xf32, #tpu.memory_space<vmem>>, vector<1x256x128xf32>,
    return
  }
  func.func @transform_0(%arg0: i32, %arg1: i32) -> (i32, i32, i32) {
    %c0_i32 = arith.constant 0 : i32
    %c0_i32_0 = arith.constant 0 : i32
    return %arg0, %arg1, %c0_i32 : i32, i32, i32
  }
  func.func @transform_1(%arg0: i32, %arg1: i32) -> (i32, i32) {
    %c0_i32 = arith.constant 0 : i32
    %c0_i32_0 = arith.constant 0 : i32
    %c0_i32_1 = arith.constant 0 : i32
    return %c0_i32, %c0_i32_0 : i32, i32
  }
  func.func @transform_2(%arg0: i32, %arg1: i32) -> (i32, i32) {
    %c0_i32 = arith.constant 0 : i32
    %c0_i32_0 = arith.constant 0 : i32
    %c0_i32_1 = arith.constant 0 : i32
    return %c0_i32, %c0_i32_0 : i32, i32
  }
  func.func @transform_3(%arg0: i32, %arg1: i32) -> (i32, i32, i32) {
    %c0_i32 = arith.constant 0 : i32
    %c0_i32_0 = arith.constant 0 : i32
    return %arg0, %arg1, %c0_i32 : i32, i32, i32
  }
}

</mosaic_0001>

<llo_original>
// kernel: conv2d_batchnorm_relu.3
$region0: #{conv2d_batchnorm_relu.3}
  #allocation0 [shape = 'u32[]', space=smem, size = 0x4, offset = 0x4, fixed_abs, tag = 'smem constant byte address 0x4 - core index']
  #allocation1 [shape = 'u32[144,128]{1,0:T(1,128)}', space=vmem, size = 0x12000, scoped, tag = 'internal scratch']
  %s0 = inlined_call_operand.vmem [shape: f32[2,256,128], index: 0, kind: input, shape index: {}]
  %s1 = inlined_call_operand.vmem [shape: f32[1,128], index: 1, kind: input, shape index: {}]
  %s2 = inlined_call_operand.vmem [shape: f32[1,128], index: 2, kind: input, shape index: {}]
  %s3 = inlined_call_operand.vmem [shape: f32[2,256,128], index: 3, kind: output, shape index: {}]
  %s4 = sld [smem:[#allocation0]]
  $region45: #{conv2d_batchnorm_relu.3} parent=0
    _
  %s6 = ssub.s32 1, %s4
  %s7 = scalar_select 0, %s6, %s4
  loop: start=0, step=1, limit=4
  $region2: #{conv2d_batchnorm_relu.3} parent=0 // loop_pre_header
    _
  $region3: #{conv2d_batchnorm_relu.3} parent=0 // loop_header
    %s9 = sphi 0, %s13
    %p10 = scmp.ge.s32.totalorder %s9, 4
    %s16 = sphi 0, %s28
    %s17 = sphi 0, %s24
    %s18 = sphi 0, %s16
    %s19 = sphi 0, %s17
    %s20 = sphi 0, %s18
    %s21 = sphi 0, %s19
    %s33 = sphi 0, %s35
    %s36 = sphi 0, %s33
    %s37 = sphi 0, %s36
    %s53 = sphi 0, %s37
    %s57 = sphi 0, %s57
    %s59 = sphi 0, %s57
    %s60 = sphi 0, %s59
    %s74 = sphi 0, %s60
    %s78 = sphi 0, %s78
    %s80 = sphi 0, %s78
    %s81 = sphi 0, %s80
    %s95 = sphi 0, %s81
    %s103 = sphi 0, %s105
    %s106 = sphi 0, %s103
    %s107 = sphi 0, %s106
    %s123 = sphi 0, %s107
  $region4: #{conv2d_batchnorm_relu.3} parent=0 // loop_header_branch
    %12 = sbr.rel (%p10) target = $region8
  $region5: #{conv2d_batchnorm_relu.3} parent=0 // loop_body
    %s14 = ssub.s32 %s9, 1
    %s15 = ssub.s32 %s9, 2
    %s22 = sadd.s32 1, %s17
    %p23 = scmp.ge.s32.totalorder %s22, 1
    %s24 = scalar_select %p23, 0, %s22
    %s25 = sadd.s32 1, %s16
    %s26 = scalar_select %p23, %s25, %s16
    %p27 = scmp.ge.s32.totalorder %s26, 2
    %s28 = scalar_select %p27, 0, %s26
    %s29 = ssub.s32 %s16, %s28
    %s30 = ssub.s32 %s17, %s24
    %s31 = sor.u32 %s29, %s30
    %p32 = scmp.eq.s32.totalorder %s31, 0
    %s34 = sadd.s32 %s33, 1
    %s35 = scalar_select %p32, %s33, %s34
    %p38 = pneg %p32
    %p39 = scmp.eq.s32.totalorder %s9, 1
    %p40 = por %p38, %p39
    %p41 = scmp.ne.s32.totalorder %s33, %s36
    %p42 = scmp.eq.s32.totalorder %s9, 0
    %p43 = por %p41, %p42
    %p44 = scmp.ne.s32.totalorder %s33, %s36
    %p45 = scmp.eq.s32.totalorder %s14, 1
    %p46 = por %p44, %p45
    %p47 = scmp.ne.s32.totalorder %s36, %s37
    %p48 = scmp.eq.s32.totalorder %s14, 0
    %p49 = por %p47, %p48
    %p50 = scmp.ne.s32.totalorder %s36, %s37
    %p51 = scmp.eq.s32.totalorder %s15, 1
    %p52 = por %p50, %p51
    %p54 = scmp.ne.s32.totalorder %s37, %s53
    %p55 = scmp.eq.s32.totalorder %s15, 0
    %p56 = por %p54, %p55
    %s58 = sadd.s32 %s57, 1
    %p61 = scmp.eq.s32.totalorder %s9, 1
    %p62 = scmp.ne.s32.totalorder %s57, %s59
    %p63 = scmp.eq.s32.totalorder %s9, 0
    %p64 = por %p62, %p63
    %p65 = scmp.ne.s32.totalorder %s57, %s59
    %p66 = scmp.eq.s32.totalorder %s14, 1
    %p67 = por %p65, %p66
    %p68 = scmp.ne.s32.totalorder %s59, %s60
    %p69 = scmp.eq.s32.totalorder %s14, 0
    %p70 = por %p68, %p69
    %p71 = scmp.ne.s32.totalorder %s59, %s60
    %p72 = scmp.eq.s32.totalorder %s15, 1
    %p73 = por %p71, %p72
    %p75 = scmp.ne.s32.totalorder %s60, %s74
    %p76 = scmp.eq.s32.totalorder %s15, 0
    %p77 = por %p75, %p76
    %s79 = sadd.s32 %s78, 1
    %p82 = scmp.eq.s32.totalorder %s9, 1
    %p83 = scmp.ne.s32.totalorder %s78, %s80
    %p84 = scmp.eq.s32.totalorder %s9, 0
    %p85 = por %p83, %p84
    %p86 = scmp.ne.s32.totalorder %s78, %s80
    %p87 = scmp.eq.s32.totalorder %s14, 1
    %p88 = por %p86, %p87
    %p89 = scmp.ne.s32.totalorder %s80, %s81
    %p90 = scmp.eq.s32.totalorder %s14, 0
    %p91 = por %p89, %p90
    %p92 = scmp.ne.s32.totalorder %s80, %s81
    %p93 = scmp.eq.s32.totalorder %s15, 1
    %p94 = por %p92, %p93
    %p96 = scmp.ne.s32.totalorder %s81, %s95
    %p97 = scmp.eq.s32.totalorder %s15, 0
    %p98 = por %p96, %p97
    %s99 = ssub.s32 %s16, %s28
    %s100 = ssub.s32 %s17, %s24
    %s101 = sor.u32 %s99, %s100
    %p102 = scmp.eq.s32.totalorder %s101, 0
    %s104 = sadd.s32 %s103, 1
    %s105 = scalar_select %p102, %s103, %s104
    %p108 = pneg %p102
    %p109 = scmp.eq.s32.totalorder %s9, 1
    %p110 = por %p108, %p109
    %p111 = scmp.ne.s32.totalorder %s103, %s106
    %p112 = scmp.eq.s32.totalorder %s9, 0
    %p113 = por %p111, %p112
    %p114 = scmp.ne.s32.totalorder %s103, %s106
    %p115 = scmp.eq.s32.totalorder %s14, 1
    %p116 = por %p114, %p115
    %p117 = scmp.ne.s32.totalorder %s106, %s107
    %p118 = scmp.eq.s32.totalorder %s14, 0
    %p119 = por %p117, %p118
    %p120 = scmp.ne.s32.totalorder %s106, %s107
    %p121 = scmp.eq.s32.totalorder %s15, 1
    %p122 = por %p120, %p121
    %p124 = scmp.ne.s32.totalorder %s107, %s123
    %p125 = scmp.eq.s32.totalorder %s15, 0
    %p126 = por %p124, %p125
    %p127 = scmp.le.s32.totalorder 1, %s9
    %p128 = scmp.lt.s32.totalorder %s9, 3
    %p129 = pnand %p127, %p128
    %p130 = pneg %p129
    // Predicated region
    $region9: #{conv2d_batchnorm_relu.3} parent=5 // pred_check
      _
    $region10: #{conv2d_batchnorm_relu.3} parent=5 // pred_check_branch
      %132 = sbr.rel (%p129) target = $region12
    $region11: #{conv2d_batchnorm_relu.3} parent=5 // pred_region
      %s133 = ssub.s32 %s9, 1
      // Predicated region
      $region13: #{conv2d_batchnorm_relu.3} parent=11 // pred_check
        %p134 = pneg %p70
      $region14: #{conv2d_batchnorm_relu.3} parent=11 // pred_check_branch
        %136 = sbr.rel (%p134) target = $region16
      $region15: #{conv2d_batchnorm_relu.3} parent=11 // pred_region
        _
      $region16: #{conv2d_batchnorm_relu.3} parent=11 // pred_fallthru
        _
      // Predicated region
      $region17: #{conv2d_batchnorm_relu.3} parent=11 // pred_check
        %p137 = pneg %p91
      $region18: #{conv2d_batchnorm_relu.3} parent=11 // pred_check_branch
        %139 = sbr.rel (%p137) target = $region20
      $region19: #{conv2d_batchnorm_relu.3} parent=11 // pred_region
        _
      $region20: #{conv2d_batchnorm_relu.3} parent=11 // pred_fallthru
        _
    $region12: #{conv2d_batchnorm_relu.3} parent=5 // pred_fallthru
      _
    %p140 = scmp.lt.s32.totalorder %s9, 2
    // Predicated region
    $region21: #{conv2d_batchnorm_relu.3} parent=5 // pred_check
      %p141 = pneg %p140
    $region22: #{conv2d_batchnorm_relu.3} parent=5 // pred_check_branch
      %143 = sbr.rel (%p141) target = $region24
    $region23: #{conv2d_batchnorm_relu.3} parent=5 // pred_region
      // Predicated region
      $region25: #{conv2d_batchnorm_relu.3} parent=23 // pred_check
        %p144 = pneg %p43
      $region26: #{conv2d_batchnorm_relu.3} parent=23 // pred_check_branch
        %146 = sbr.rel (%p144) target = $region28
      $region27: #{conv2d_batchnorm_relu.3} parent=23 // pred_region
        %s147 = smul.u32 32, %s17
        %p148 = scmp.lt.s32.totalorder %s16, 1
        %s149 = scalar_select %p148, %s16, 1
        %p150 = scmp.lt.s32.totalorder %s147, 31
        %s151 = scalar_select %p150, %s147, 31
        %s152 = smul.addr %s149, 32
        %s153 = sadd.s32 %s151, %s152
        %s154 = smul.addr %s153, 8
        %s155 = scalar_lea.vmem %s0, %s154
        %s156 = smul.u32 32, %s17
      $region28: #{conv2d_batchnorm_relu.3} parent=23 // pred_fallthru
        _
    $region24: #{conv2d_batchnorm_relu.3} parent=5 // pred_fallthru
      _
    %p157 = scmp.le.s32.totalorder 1, %s9
    %p158 = scmp.lt.s32.totalorder %s9, 3
    %p159 = pnand %p157, %p158
    %p160 = pneg %p159
    // Predicated region
    $region29: #{conv2d_batchnorm_relu.3} parent=5 // pred_check
      _
    $region30: #{conv2d_batchnorm_relu.3} parent=5 // pred_check_branch
      %162 = sbr.rel (%p159) target = $region32
    $region31: #{conv2d_batchnorm_relu.3} parent=5 // pred_region
      %s163 = ssub.s32 %s9, 1
      %s164 = smul.u32 32, %s19
      %p165 = scmp.lt.s32.totalorder %s18, 1
      %s166 = scalar_select %p165, %s18, 1
      %p167 = scmp.lt.s32.totalorder %s164, 31
      %s168 = scalar_select %p167, %s164, 31
      %s169 = smul.addr %s166, 32
      %s170 = sadd.s32 %s168, %s169
      %s171 = smul.addr %s170, 8
      %s172 = scalar_lea.vmem %s0, %s171
      %p173 = pneg %p49
      %p174 = pneg %p46
      %p175 = pneg %p70
      %p176 = pneg %p67
      %p177 = pneg %p91
      %p178 = pneg %p88
      %p179 = pneg %p119
      %p180 = pneg %p116
      %s181 = smul.u32 32, %s19
      %p182 = scmp.lt.s32.totalorder %s18, 1
      %s183 = scalar_select %p182, %s18, 1
      %p184 = scmp.lt.s32.totalorder %s181, 31
      %s185 = scalar_select %p184, %s181, 31
      %s186 = smul.addr %s183, 32
      %s187 = sadd.s32 %s185, %s186
      %s188 = smul.addr %s187, 8
      %s189 = scalar_lea.vmem %s3, %s188
      %s190 = smul.u32 32, %s19
      %p191 = scmp.lt.s32.totalorder %s18, 1
      %s192 = scalar_select %p191, %s18, 1
      %p193 = scmp.lt.s32.totalorder %s190, 31
      %s194 = scalar_select %p193, %s190, 31
      %s195 = smul.addr %s192, 32
      %s196 = sadd.s32 %s194, %s195
      %s197 = smul.addr %s196, 8
      %s198 = scalar_lea.vmem %s0, %s197
      %s199 = smul.u32 32, %s19
      %s200 = smul.u32 32, %s19
      %p201 = scmp.lt.s32.totalorder %s18, 1
      %s202 = scalar_select %p201, %s18, 1
      %p203 = scmp.lt.s32.totalorder %s200, 31
      %s204 = scalar_select %p203, %s200, 31
      %s205 = smul.addr %s202, 32
      %s206 = sadd.s32 %s204, %s205
      %s207 = smul.addr %s206, 8
      %s208 = scalar_lea.vmem %s3, %s207
      %s209 = smul.u32 32, %s19
      %v210 = vld [vmem:[%s198] sm:$0xff]
      %v211 = vld [vmem:[%s198 + $0x8] sm:$0xff]
      %v212 = vld [vmem:[%s198 + $0x10] sm:$0xff]
      %v213 = vld [vmem:[%s198 + $0x18] sm:$0xff]
      %v214 = vld [vmem:[%s198 + $0x20] sm:$0xff]
      %v215 = vld [vmem:[%s198 + $0x28] sm:$0xff]
      %v216 = vld [vmem:[%s198 + $0x30] sm:$0xff]
      %v217 = vld [vmem:[%s198 + $0x38] sm:$0xff]
      %v218 = vld [vmem:[%s198 + $0x40] sm:$0xff]
      %v219 = vld [vmem:[%s198 + $0x48] sm:$0xff]
      %v220 = vld [vmem:[%s198 + $0x50] sm:$0xff]
      %v221 = vld [vmem:[%s198 + $0x58] sm:$0xff]
      %v222 = vld [vmem:[%s198 + $0x60] sm:$0xff]
      %v223 = vld [vmem:[%s198 + $0x68] sm:$0xff]
      %v224 = vld [vmem:[%s198 + $0x70] sm:$0xff]
      %v225 = vld [vmem:[%s198 + $0x78] sm:$0xff]
      %v226 = vld [vmem:[%s198 + $0x80] sm:$0xff]
      %v227 = vld [vmem:[%s198 + $0x88] sm:$0xff]
      %v228 = vld [vmem:[%s198 + $0x90] sm:$0xff]
      %v229 = vld [vmem:[%s198 + $0x98] sm:$0xff]
      %v230 = vld [vmem:[%s198 + $0xa0] sm:$0xff]
      %v231 = vld [vmem:[%s198 + $0xa8] sm:$0xff]
      %v232 = vld [vmem:[%s198 + $0xb0] sm:$0xff]
      %v233 = vld [vmem:[%s198 + $0xb8] sm:$0xff]
      %v234 = vld [vmem:[%s198 + $0xc0] sm:$0xff]
      %v235 = vld [vmem:[%s198 + $0xc8] sm:$0xff]
      %v236 = vld [vmem:[%s198 + $0xd0] sm:$0xff]
      %v237 = vld [vmem:[%s198 + $0xd8] sm:$0xff]
      %v238 = vld [vmem:[%s198 + $0xe0] sm:$0xff]
      %v239 = vld [vmem:[%s198 + $0xe8] sm:$0xff]
      %v240 = vld [vmem:[%s198 + $0xf0] sm:$0xff]
      %v241 = vld [vmem:[%s198 + $0xf8] sm:$0xff]
      %v242 = vld [vmem:[%s1] sm:$0x1]
      %v244 = vlaneseq
      %v245 = vshrl.u32 %v244, 7
      %v246 = vsub.s32 0, %v245
      %v247 = vrot.slane %v242, %v246
      %v249 = vmul.f32 %v210, %v247
      %v250 = vmul.f32 %v211, %v247
      %v251 = vmul.f32 %v212, %v247
      %v252 = vmul.f32 %v213, %v247
      %v253 = vmul.f32 %v214, %v247
      %v254 = vmul.f32 %v215, %v247
      %v255 = vmul.f32 %v216, %v247
      %v256 = vmul.f32 %v217, %v247
      %v257 = vmul.f32 %v218, %v247
      %v258 = vmul.f32 %v219, %v247
      %v259 = vmul.f32 %v220, %v247
      %v260 = vmul.f32 %v221, %v247
      %v261 = vmul.f32 %v222, %v247
      %v262 = vmul.f32 %v223, %v247
      %v263 = vmul.f32 %v224, %v247
      %v264 = vmul.f32 %v225, %v247
      %v265 = vmul.f32 %v226, %v247
      %v266 = vmul.f32 %v227, %v247
      %v267 = vmul.f32 %v228, %v247
      %v268 = vmul.f32 %v229, %v247
      %v269 = vmul.f32 %v230, %v247
      %v270 = vmul.f32 %v231, %v247
      %v271 = vmul.f32 %v232, %v247
      %v272 = vmul.f32 %v233, %v247
      %v273 = vmul.f32 %v234, %v247
      %v274 = vmul.f32 %v235, %v247
      %v275 = vmul.f32 %v236, %v247
      %v276 = vmul.f32 %v237, %v247
      %v277 = vmul.f32 %v238, %v247
      %v278 = vmul.f32 %v239, %v247
      %v279 = vmul.f32 %v240, %v247
      %v280 = vmul.f32 %v241, %v247
      %v281 = vld [vmem:[%s2] sm:$0x1]
      %v283 = vlaneseq
      %v284 = vshrl.u32 %v283, 7
      %v285 = vsub.s32 0, %v284
      %v286 = vrot.slane %v281, %v285
      %v288 = vadd.f32 %v249, %v286
      %v289 = vadd.f32 %v250, %v286
      %v290 = vadd.f32 %v251, %v286
      %v291 = vadd.f32 %v252, %v286
      %v292 = vadd.f32 %v253, %v286
      %v293 = vadd.f32 %v254, %v286
      %v294 = vadd.f32 %v255, %v286
      %v295 = vadd.f32 %v256, %v286
      %v296 = vadd.f32 %v257, %v286
      %v297 = vadd.f32 %v258, %v286
      %v298 = vadd.f32 %v259, %v286
      %v299 = vadd.f32 %v260, %v286
      %v300 = vadd.f32 %v261, %v286
      %v301 = vadd.f32 %v262, %v286
      %v302 = vadd.f32 %v263, %v286
      %v303 = vadd.f32 %v264, %v286
      %v304 = vadd.f32 %v265, %v286
      %v305 = vadd.f32 %v266, %v286
      %v306 = vadd.f32 %v267, %v286
      %v307 = vadd.f32 %v268, %v286
      %v308 = vadd.f32 %v269, %v286
      %v309 = vadd.f32 %v270, %v286
      %v310 = vadd.f32 %v271, %v286
      %v311 = vadd.f32 %v272, %v286
      %v312 = vadd.f32 %v273, %v286
      %v313 = vadd.f32 %v274, %v286
      %v314 = vadd.f32 %v275, %v286
      %v315 = vadd.f32 %v276, %v286
      %v316 = vadd.f32 %v277, %v286
      %v317 = vadd.f32 %v278, %v286
      %v318 = vadd.f32 %v279, %v286
      %v319 = vadd.f32 %v280, %v286
      %v320 = vmax.f32 %v288, 0.0
      %v321 = vmax.f32 %v289, 0.0
      %v322 = vmax.f32 %v290, 0.0
      %v323 = vmax.f32 %v291, 0.0
      %v324 = vmax.f32 %v292, 0.0
      %v325 = vmax.f32 %v293, 0.0
      %v326 = vmax.f32 %v294, 0.0
      %v327 = vmax.f32 %v295, 0.0
      %v328 = vmax.f32 %v296, 0.0
      %v329 = vmax.f32 %v297, 0.0
      %v330 = vmax.f32 %v298, 0.0
      %v331 = vmax.f32 %v299, 0.0
      %v332 = vmax.f32 %v300, 0.0
      %v333 = vmax.f32 %v301, 0.0
      %v334 = vmax.f32 %v302, 0.0
      %v335 = vmax.f32 %v303, 0.0
      %v336 = vmax.f32 %v304, 0.0
      %v337 = vmax.f32 %v305, 0.0
      %v338 = vmax.f32 %v306, 0.0
      %v339 = vmax.f32 %v307, 0.0
      %v340 = vmax.f32 %v308, 0.0
      %v341 = vmax.f32 %v309, 0.0
      %v342 = vmax.f32 %v310, 0.0
      %v343 = vmax.f32 %v311, 0.0
      %v344 = vmax.f32 %v312, 0.0
      %v345 = vmax.f32 %v313, 0.0
      %v346 = vmax.f32 %v314, 0.0
      %v347 = vmax.f32 %v315, 0.0
      %v348 = vmax.f32 %v316, 0.0
      %v349 = vmax.f32 %v317, 0.0
      %v350 = vmax.f32 %v318, 0.0
      %v351 = vmax.f32 %v319, 0.0
      %352 = vst [vmem:[%s208] sm:$0xff] %v320
      %353 = vst [vmem:[%s208 + $0x8] sm:$0xff] %v321
      %354 = vst [vmem:[%s208 + $0x10] sm:$0xff] %v322
      %355 = vst [vmem:[%s208 + $0x18] sm:$0xff] %v323
      %356 = vst [vmem:[%s208 + $0x20] sm:$0xff] %v324
      %357 = vst [vmem:[%s208 + $0x28] sm:$0xff] %v325
      %358 = vst [vmem:[%s208 + $0x30] sm:$0xff] %v326
      %359 = vst [vmem:[%s208 + $0x38] sm:$0xff] %v327
      %360 = vst [vmem:[%s208 + $0x40] sm:$0xff] %v328
      %361 = vst [vmem:[%s208 + $0x48] sm:$0xff] %v329
      %362 = vst [vmem:[%s208 + $0x50] sm:$0xff] %v330
      %363 = vst [vmem:[%s208 + $0x58] sm:$0xff] %v331
      %364 = vst [vmem:[%s208 + $0x60] sm:$0xff] %v332
      %365 = vst [vmem:[%s208 + $0x68] sm:$0xff] %v333
      %366 = vst [vmem:[%s208 + $0x70] sm:$0xff] %v334
      %367 = vst [vmem:[%s208 + $0x78] sm:$0xff] %v335
      %368 = vst [vmem:[%s208 + $0x80] sm:$0xff] %v336
      %369 = vst [vmem:[%s208 + $0x88] sm:$0xff] %v337
      %370 = vst [vmem:[%s208 + $0x90] sm:$0xff] %v338
      %371 = vst [vmem:[%s208 + $0x98] sm:$0xff] %v339
      %372 = vst [vmem:[%s208 + $0xa0] sm:$0xff] %v340
      %373 = vst [vmem:[%s208 + $0xa8] sm:$0xff] %v341
      %374 = vst [vmem:[%s208 + $0xb0] sm:$0xff] %v342
      %375 = vst [vmem:[%s208 + $0xb8] sm:$0xff] %v343
      %376 = vst [vmem:[%s208 + $0xc0] sm:$0xff] %v344
      %377 = vst [vmem:[%s208 + $0xc8] sm:$0xff] %v345
      %378 = vst [vmem:[%s208 + $0xd0] sm:$0xff] %v346
      %379 = vst [vmem:[%s208 + $0xd8] sm:$0xff] %v347
      %380 = vst [vmem:[%s208 + $0xe0] sm:$0xff] %v348
      %381 = vst [vmem:[%s208 + $0xe8] sm:$0xff] %v349
      %382 = vst [vmem:[%s208 + $0xf0] sm:$0xff] %v350
      %383 = vst [vmem:[%s208 + $0xf8] sm:$0xff] %v351
      %s384 = smul.u32 32, %s19
      %p385 = scmp.lt.s32.totalorder %s18, 1
      %s386 = scalar_select %p385, %s18, 1
      %p387 = scmp.lt.s32.totalorder %s384, 31
      %s388 = scalar_select %p387, %s384, 31
      %s389 = smul.addr %s386, 32
      %s390 = sadd.s32 %s388, %s389
      %s391 = smul.addr %s390, 8
      %s392 = scalar_lea.vmem %s3, %s391
      // Predicated region
      $region33: #{conv2d_batchnorm_relu.3} parent=31 // pred_check
        %p393 = pneg %p116
      $region34: #{conv2d_batchnorm_relu.3} parent=31 // pred_check_branch
        %395 = sbr.rel (%p393) target = $region36
      $region35: #{conv2d_batchnorm_relu.3} parent=31 // pred_region
        %s396 = smul.u32 32, %s19
      $region36: #{conv2d_batchnorm_relu.3} parent=31 // pred_fallthru
        _
    $region32: #{conv2d_batchnorm_relu.3} parent=5 // pred_fallthru
      _
    %p397 = scmp.le.s32.totalorder 2, %s9
    // Predicated region
    $region37: #{conv2d_batchnorm_relu.3} parent=5 // pred_check
      %p398 = pneg %p397
    $region38: #{conv2d_batchnorm_relu.3} parent=5 // pred_check_branch
      %400 = sbr.rel (%p398) target = $region40
    $region39: #{conv2d_batchnorm_relu.3} parent=5 // pred_region
      %s401 = ssub.s32 %s9, 2
      // Predicated region
      $region41: #{conv2d_batchnorm_relu.3} parent=39 // pred_check
        %p402 = pneg %p122
      $region42: #{conv2d_batchnorm_relu.3} parent=39 // pred_check_branch
        %404 = sbr.rel (%p402) target = $region44
      $region43: #{conv2d_batchnorm_relu.3} parent=39 // pred_region
        %s405 = smul.u32 32, %s21
        %p406 = scmp.lt.s32.totalorder %s20, 1
        %s407 = scalar_select %p406, %s20, 1
        %p408 = scmp.lt.s32.totalorder %s405, 31
        %s409 = scalar_select %p408, %s405, 31
        %s410 = smul.addr %s407, 32
        %s411 = sadd.s32 %s409, %s410
        %s412 = smul.addr %s411, 8
        %s413 = scalar_lea.vmem %s3, %s412
      $region44: #{conv2d_batchnorm_relu.3} parent=39 // pred_fallthru
        _
    $region40: #{conv2d_batchnorm_relu.3} parent=5 // pred_fallthru
      _
  $region6: #{conv2d_batchnorm_relu.3} parent=0 // loop_footer
    %s13 = sadd.s32 1, %s9
  $region7: #{conv2d_batchnorm_relu.3} parent=0 // loop_footer_branch
    %8 = sbr.rel target = $region3
  $region8: #{conv2d_batchnorm_relu.3} parent=0 // loop_exit
    _

// kernel: conv2d_batchnorm_relu.2
$region0: #{conv2d_batchnorm_relu.2}
  #allocation0 [shape = 'u32[]', space=smem, size = 0x4, offset = 0x4, fixed_abs, tag = 'smem constant byte address 0x4 - core index']
  #allocation1 [shape = 'u32[144,128]{1,0:T(1,128)}', space=vmem, size = 0x12000, scoped, tag = 'internal scratch']
  %s0 = inlined_call_operand.vmem [shape: f32[2,18,18,4], index: 0, kind: input, shape index: {}]
  %s1 = inlined_call_operand.vmem [shape: f32[36,128], index: 1, kind: input, shape index: {}]
  %s2 = inlined_call_operand.vmem [shape: f32[1,128], index: 2, kind: input, shape index: {}]
  %s3 = inlined_call_operand.vmem [shape: f32[2,256,128], index: 3, kind: output, shape index: {0}]
  %s4 = inlined_call_operand.vmem [shape: f32[2,2,128], index: 4, kind: output, shape index: {1}]
  %5 = xla_tuple %s3, %s4
  %s6 = sld [smem:[#allocation0]]
  $region57: #{conv2d_batchnorm_relu.2} parent=0
    _
  %s8 = ssub.s32 1, %s6
  %s9 = scalar_select 0, %s8, %s6
  loop: start=0, step=1, limit=4
  $region2: #{conv2d_batchnorm_relu.2} parent=0 // loop_pre_header
    _
  $region3: #{conv2d_batchnorm_relu.2} parent=0 // loop_header
    %s11 = sphi 0, %s15
    %p12 = scmp.ge.s32.totalorder %s11, 4
    %s18 = sphi 0, %s30
    %s19 = sphi 0, %s26
    %s20 = sphi 0, %s18
    %s21 = sphi 0, %s19
    %s22 = sphi 0, %s20
    %s23 = sphi 0, %s21
    %s33 = sphi 0, %s35
    %s36 = sphi 0, %s33
    %s37 = sphi 0, %s36
    %s53 = sphi 0, %s37
    %s57 = sphi 0, %s57
    %s59 = sphi 0, %s57
    %s60 = sphi 0, %s59
    %s74 = sphi 0, %s60
    %s78 = sphi 0, %s78
    %s80 = sphi 0, %s78
    %s81 = sphi 0, %s80
    %s95 = sphi 0, %s81
    %s103 = sphi 0, %s105
    %s106 = sphi 0, %s103
    %s107 = sphi 0, %s106
    %s123 = sphi 0, %s107
    %s129 = sphi 0, %s131
    %s132 = sphi 0, %s129
    %s133 = sphi 0, %s132
    %s149 = sphi 0, %s133
  $region4: #{conv2d_batchnorm_relu.2} parent=0 // loop_header_branch
    %14 = sbr.rel (%p12) target = $region8
  $region5: #{conv2d_batchnorm_relu.2} parent=0 // loop_body
    %s16 = ssub.s32 %s11, 1
    %s17 = ssub.s32 %s11, 2
    %s24 = sadd.s32 1, %s19
    %p25 = scmp.ge.s32.totalorder %s24, 1
    %s26 = scalar_select %p25, 0, %s24
    %s27 = sadd.s32 1, %s18
    %s28 = scalar_select %p25, %s27, %s18
    %p29 = scmp.ge.s32.totalorder %s28, 2
    %s30 = scalar_select %p29, 0, %s28
    %s31 = ssub.s32 %s18, %s30
    %p32 = scmp.eq.s32.totalorder %s31, 0
    %s34 = sadd.s32 %s33, 1
    %s35 = scalar_select %p32, %s33, %s34
    %p38 = pneg %p32
    %p39 = scmp.eq.s32.totalorder %s11, 1
    %p40 = por %p38, %p39
    %p41 = scmp.ne.s32.totalorder %s33, %s36
    %p42 = scmp.eq.s32.totalorder %s11, 0
    %p43 = por %p41, %p42
    %p44 = scmp.ne.s32.totalorder %s33, %s36
    %p45 = scmp.eq.s32.totalorder %s16, 1
    %p46 = por %p44, %p45
    %p47 = scmp.ne.s32.totalorder %s36, %s37
    %p48 = scmp.eq.s32.totalorder %s16, 0
    %p49 = por %p47, %p48
    %p50 = scmp.ne.s32.totalorder %s36, %s37
    %p51 = scmp.eq.s32.totalorder %s17, 1
    %p52 = por %p50, %p51
    %p54 = scmp.ne.s32.totalorder %s37, %s53
    %p55 = scmp.eq.s32.totalorder %s17, 0
    %p56 = por %p54, %p55
    %s58 = sadd.s32 %s57, 1
    %p61 = scmp.eq.s32.totalorder %s11, 1
    %p62 = scmp.ne.s32.totalorder %s57, %s59
    %p63 = scmp.eq.s32.totalorder %s11, 0
    %p64 = por %p62, %p63
    %p65 = scmp.ne.s32.totalorder %s57, %s59
    %p66 = scmp.eq.s32.totalorder %s16, 1
    %p67 = por %p65, %p66
    %p68 = scmp.ne.s32.totalorder %s59, %s60
    %p69 = scmp.eq.s32.totalorder %s16, 0
    %p70 = por %p68, %p69
    %p71 = scmp.ne.s32.totalorder %s59, %s60
    %p72 = scmp.eq.s32.totalorder %s17, 1
    %p73 = por %p71, %p72
    %p75 = scmp.ne.s32.totalorder %s60, %s74
    %p76 = scmp.eq.s32.totalorder %s17, 0
    %p77 = por %p75, %p76
    %s79 = sadd.s32 %s78, 1
    %p82 = scmp.eq.s32.totalorder %s11, 1
    %p83 = scmp.ne.s32.totalorder %s78, %s80
    %p84 = scmp.eq.s32.totalorder %s11, 0
    %p85 = por %p83, %p84
    %p86 = scmp.ne.s32.totalorder %s78, %s80
    %p87 = scmp.eq.s32.totalorder %s16, 1
    %p88 = por %p86, %p87
    %p89 = scmp.ne.s32.totalorder %s80, %s81
    %p90 = scmp.eq.s32.totalorder %s16, 0
    %p91 = por %p89, %p90
    %p92 = scmp.ne.s32.totalorder %s80, %s81
    %p93 = scmp.eq.s32.totalorder %s17, 1
    %p94 = por %p92, %p93
    %p96 = scmp.ne.s32.totalorder %s81, %s95
    %p97 = scmp.eq.s32.totalorder %s17, 0
    %p98 = por %p96, %p97
    %s99 = ssub.s32 %s18, %s30
    %s100 = ssub.s32 %s19, %s26
    %s101 = sor.u32 %s99, %s100
    %p102 = scmp.eq.s32.totalorder %s101, 0
    %s104 = sadd.s32 %s103, 1
    %s105 = scalar_select %p102, %s103, %s104
    %p108 = pneg %p102
    %p109 = scmp.eq.s32.totalorder %s11, 1
    %p110 = por %p108, %p109
    %p111 = scmp.ne.s32.totalorder %s103, %s106
    %p112 = scmp.eq.s32.totalorder %s11, 0
    %p113 = por %p111, %p112
    %p114 = scmp.ne.s32.totalorder %s103, %s106
    %p115 = scmp.eq.s32.totalorder %s16, 1
    %p116 = por %p114, %p115
    %p117 = scmp.ne.s32.totalorder %s106, %s107
    %p118 = scmp.eq.s32.totalorder %s16, 0
    %p119 = por %p117, %p118
    %p120 = scmp.ne.s32.totalorder %s106, %s107
    %p121 = scmp.eq.s32.totalorder %s17, 1
    %p122 = por %p120, %p121
    %p124 = scmp.ne.s32.totalorder %s107, %s123
    %p125 = scmp.eq.s32.totalorder %s17, 0
    %p126 = por %p124, %p125
    %s127 = ssub.s32 %s18, %s30
    %p128 = scmp.eq.s32.totalorder %s127, 0
    %s130 = sadd.s32 %s129, 1
    %s131 = scalar_select %p128, %s129, %s130
    %p134 = pneg %p128
    %p135 = scmp.eq.s32.totalorder %s11, 1
    %p136 = por %p134, %p135
    %p137 = scmp.ne.s32.totalorder %s129, %s132
    %p138 = scmp.eq.s32.totalorder %s11, 0
    %p139 = por %p137, %p138
    %p140 = scmp.ne.s32.totalorder %s129, %s132
    %p141 = scmp.eq.s32.totalorder %s16, 1
    %p142 = por %p140, %p141
    %p143 = scmp.ne.s32.totalorder %s132, %s133
    %p144 = scmp.eq.s32.totalorder %s16, 0
    %p145 = por %p143, %p144
    %p146 = scmp.ne.s32.totalorder %s132, %s133
    %p147 = scmp.eq.s32.totalorder %s17, 1
    %p148 = por %p146, %p147
    %p150 = scmp.ne.s32.totalorder %s133, %s149
    %p151 = scmp.eq.s32.totalorder %s17, 0
    %p152 = por %p150, %p151
    %p153 = scmp.le.s32.totalorder 1, %s11
    %p154 = scmp.lt.s32.totalorder %s11, 3
    %p155 = pnand %p153, %p154
    %p156 = pneg %p155
    // Predicated region
    $region9: #{conv2d_batchnorm_relu.2} parent=5 // pred_check
      _
    $region10: #{conv2d_batchnorm_relu.2} parent=5 // pred_check_branch
      %158 = sbr.rel (%p155) target = $region12
    $region11: #{conv2d_batchnorm_relu.2} parent=5 // pred_region
      %s159 = ssub.s32 %s11, 1
      // Predicated region
      $region13: #{conv2d_batchnorm_relu.2} parent=11 // pred_check
        %p160 = pneg %p70
      $region14: #{conv2d_batchnorm_relu.2} parent=11 // pred_check_branch
        %162 = sbr.rel (%p160) target = $region16
      $region15: #{conv2d_batchnorm_relu.2} parent=11 // pred_region
        _
      $region16: #{conv2d_batchnorm_relu.2} parent=11 // pred_fallthru
        _
      // Predicated region
      $region17: #{conv2d_batchnorm_relu.2} parent=11 // pred_check
        %p163 = pneg %p91
      $region18: #{conv2d_batchnorm_relu.2} parent=11 // pred_check_branch
        %165 = sbr.rel (%p163) target = $region20
      $region19: #{conv2d_batchnorm_relu.2} parent=11 // pred_region
        _
      $region20: #{conv2d_batchnorm_relu.2} parent=11 // pred_fallthru
        _
    $region12: #{conv2d_batchnorm_relu.2} parent=5 // pred_fallthru
      _
    %p166 = scmp.lt.s32.totalorder %s11, 2
    // Predicated region
    $region21: #{conv2d_batchnorm_relu.2} parent=5 // pred_check
      %p167 = pneg %p166
    $region22: #{conv2d_batchnorm_relu.2} parent=5 // pred_check_branch
      %169 = sbr.rel (%p167) target = $region24
    $region23: #{conv2d_batchnorm_relu.2} parent=5 // pred_region
      // Predicated region
      $region25: #{conv2d_batchnorm_relu.2} parent=23 // pred_check
        %p170 = pneg %p43
      $region26: #{conv2d_batchnorm_relu.2} parent=23 // pred_check_branch
        %172 = sbr.rel (%p170) target = $region28
      $region27: #{conv2d_batchnorm_relu.2} parent=23 // pred_region
        %p173 = scmp.lt.s32.totalorder %s18, 1
        %s174 = scalar_select %p173, %s18, 1
        %s175 = smul.addr %s174, 54
        %s176 = smul.addr %s175, 8
        %s177 = scalar_lea.vmem %s0, %s176
      $region28: #{conv2d_batchnorm_relu.2} parent=23 // pred_fallthru
        _
    $region24: #{conv2d_batchnorm_relu.2} parent=5 // pred_fallthru
      _
    %p178 = scmp.le.s32.totalorder 1, %s11
    %p179 = scmp.lt.s32.totalorder %s11, 3
    %p180 = pnand %p178, %p179
    %p181 = pneg %p180
    // Predicated region
    $region29: #{conv2d_batchnorm_relu.2} parent=5 // pred_check
      _
    $region30: #{conv2d_batchnorm_relu.2} parent=5 // pred_check_branch
      %183 = sbr.rel (%p180) target = $region32
    $region31: #{conv2d_batchnorm_relu.2} parent=5 // pred_region
      %s184 = ssub.s32 %s11, 1
      %p185 = scmp.lt.s32.totalorder %s20, 1
      %s186 = scalar_select %p185, %s20, 1
      %s187 = smul.addr %s186, 54
      %s188 = smul.addr %s187, 8
      %s189 = scalar_lea.vmem %s0, %s188
      %p190 = pneg %p49
      %p191 = pneg %p46
      %p192 = pneg %p70
      %p193 = pneg %p67
      %p194 = pneg %p91
      %p195 = pneg %p88
      %p196 = pneg %p119
      %p197 = pneg %p116
      %s198 = smul.u32 32, %s21
      %p199 = scmp.lt.s32.totalorder %s20, 1
      %s200 = scalar_select %p199, %s20, 1
      %p201 = scmp.lt.s32.totalorder %s198, 31
      %s202 = scalar_select %p201, %s198, 31
      %s203 = smul.addr %s200, 32
      %s204 = sadd.s32 %s202, %s203
      %s205 = smul.addr %s204, 8
      %s206 = scalar_lea.vmem %s3, %s205
      %p207 = pneg %p145
      %p208 = pneg %p142
      %p209 = scmp.lt.s32.totalorder %s20, 1
      %s210 = scalar_select %p209, %s20, 1
      %s211 = smul.addr %s210, 2
      %s212 = scalar_lea.vmem %s4, %s211
      %p213 = scmp.lt.s32.totalorder %s20, 1
      %s214 = scalar_select %p213, %s20, 1
      %s215 = smul.addr %s214, 54
      %s216 = smul.addr %s215, 8
      %s217 = scalar_lea.vmem %s0, %s216
      %s218 = smul.u32 32, %s21
      %p219 = scmp.lt.s32.totalorder %s20, 1
      %s220 = scalar_select %p219, %s20, 1
      %p221 = scmp.lt.s32.totalorder %s218, 31
      %s222 = scalar_select %p221, %s218, 31
      %s223 = smul.addr %s220, 32
      %s224 = sadd.s32 %s222, %s223
      %s225 = smul.addr %s224, 8
      %s226 = scalar_lea.vmem %s3, %s225
      %s227 = smul.u32 32, %s21
      %p228 = scmp.lt.s32.totalorder %s20, 1
      %s229 = scalar_select %p228, %s20, 1
      %s230 = smul.addr %s229, 2
      %s231 = scalar_lea.vmem %s4, %s230
      %s232 = smul.u32 %s21, 16
      %s233 = smul.u32 %s232, 24
      %s234 = scalar_lea.vmem %s217, %s233
      %v235 = vld [vmem:[%s234] sm:$0xff]
      %v236 = vld [vmem:[%s234 + $0x8] sm:$0xff]
      %v237 = vld [vmem:[%s234 + $0x10] sm:$0x3]
      %v238 = vld [vmem:[%s234 + $0x18] sm:$0xff]
      %v239 = vld [vmem:[%s234 + $0x20] sm:$0xff]
      %v240 = vld [vmem:[%s234 + $0x28] sm:$0x3]
      %v241 = vld [vmem:[%s234 + $0x30] sm:$0xff]
      %v242 = vld [vmem:[%s234 + $0x38] sm:$0xff]
      %v243 = vld [vmem:[%s234 + $0x40] sm:$0x3]
      %v244 = vld [vmem:[%s234 + $0x48] sm:$0xff]
      %v245 = vld [vmem:[%s234 + $0x50] sm:$0xff]
      %v246 = vld [vmem:[%s234 + $0x58] sm:$0x3]
      %v247 = vld [vmem:[%s234 + $0x60] sm:$0xff]
      %v248 = vld [vmem:[%s234 + $0x68] sm:$0xff]
      %v249 = vld [vmem:[%s234 + $0x70] sm:$0x3]
      %v250 = vld [vmem:[%s234 + $0x78] sm:$0xff]
      %v251 = vld [vmem:[%s234 + $0x80] sm:$0xff]
      %v252 = vld [vmem:[%s234 + $0x88] sm:$0x3]
      %v253 = vld [vmem:[%s234 + $0x90] sm:$0xff]
      %v254 = vld [vmem:[%s234 + $0x98] sm:$0xff]
      %v255 = vld [vmem:[%s234 + $0xa0] sm:$0x3]
      %v256 = vld [vmem:[%s234 + $0xa8] sm:$0xff]
      %v257 = vld [vmem:[%s234 + $0xb0] sm:$0xff]
      %v258 = vld [vmem:[%s234 + $0xb8] sm:$0x3]
      %v259 = vld [vmem:[%s234 + $0xc0] sm:$0xff]
      %v260 = vld [vmem:[%s234 + $0xc8] sm:$0xff]
      %v261 = vld [vmem:[%s234 + $0xd0] sm:$0x3]
      %v262 = vld [vmem:[%s234 + $0xd8] sm:$0xff]
      %v263 = vld [vmem:[%s234 + $0xe0] sm:$0xff]
      %v264 = vld [vmem:[%s234 + $0xe8] sm:$0x3]
      %v265 = vld [vmem:[%s234 + $0xf0] sm:$0xff]
      %v266 = vld [vmem:[%s234 + $0xf8] sm:$0xff]
      %v267 = vld [vmem:[%s234 + $0x100] sm:$0x3]
      %v268 = vld [vmem:[%s234 + $0x108] sm:$0xff]
      %v269 = vld [vmem:[%s234 + $0x110] sm:$0xff]
      %v270 = vld [vmem:[%s234 + $0x118] sm:$0x3]
      %v271 = vld [vmem:[%s234 + $0x120] sm:$0xff]
      %v272 = vld [vmem:[%s234 + $0x128] sm:$0xff]
      %v273 = vld [vmem:[%s234 + $0x130] sm:$0x3]
      %v274 = vld [vmem:[%s234 + $0x138] sm:$0xff]
      %v275 = vld [vmem:[%s234 + $0x140] sm:$0xff]
      %v276 = vld [vmem:[%s234 + $0x148] sm:$0x3]
      %v277 = vld [vmem:[%s234 + $0x150] sm:$0xff]
      %v278 = vld [vmem:[%s234 + $0x158] sm:$0xff]
      %v279 = vld [vmem:[%s234 + $0x160] sm:$0x3]
      %v280 = vld [vmem:[%s234 + $0x168] sm:$0xff]
      %v281 = vld [vmem:[%s234 + $0x170] sm:$0xff]
      %v282 = vld [vmem:[%s234 + $0x178] sm:$0x3]
      %v283 = vld [vmem:[%s234 + $0x180] sm:$0xff]
      %v284 = vld [vmem:[%s234 + $0x188] sm:$0xff]
      %v285 = vld [vmem:[%s234 + $0x190] sm:$0x3]
      %v286 = vld [vmem:[%s234 + $0x198] sm:$0xff]
      %v287 = vld [vmem:[%s234 + $0x1a0] sm:$0xff]
      %v288 = vld [vmem:[%s234 + $0x1a8] sm:$0x3]
      %vm337 = vcmask 1046528
      %v338 = vrot.slane %v235, 1
      %v339 = vrot.slane %v236, 1
      %v340 = vsel %vm337, %v338, %v339
      %v341 = vrot.slane %v237, 1
      %v342 = vsel %vm337, %v339, %v341
      %v343 = vrot.slane %v238, 1
      %v344 = vrot.slane %v239, 1
      %v345 = vsel %vm337, %v343, %v344
      %v346 = vrot.slane %v240, 1
      %v347 = vsel %vm337, %v344, %v346
      %v348 = vrot.slane %v241, 1
      %v349 = vrot.slane %v242, 1
      %v350 = vsel %vm337, %v348, %v349
      %v351 = vrot.slane %v243, 1
      %v352 = vsel %vm337, %v349, %v351
      %v353 = vrot.slane %v244, 1
      %v354 = vrot.slane %v245, 1
      %v355 = vsel %vm337, %v353, %v354
      %v356 = vrot.slane %v246, 1
      %v357 = vsel %vm337, %v354, %v356
      %v358 = vrot.slane %v247, 1
      %v359 = vrot.slane %v248, 1
      %v360 = vsel %vm337, %v358, %v359
      %v361 = vrot.slane %v249, 1
      %v362 = vsel %vm337, %v359, %v361
      %v363 = vrot.slane %v250, 1
      %v364 = vrot.slane %v251, 1
      %v365 = vsel %vm337, %v363, %v364
      %v366 = vrot.slane %v252, 1
      %v367 = vsel %vm337, %v364, %v366
      %v368 = vrot.slane %v253, 1
      %v369 = vrot.slane %v254, 1
      %v370 = vsel %vm337, %v368, %v369
      %v371 = vrot.slane %v255, 1
      %v372 = vsel %vm337, %v369, %v371
      %v373 = vrot.slane %v256, 1
      %v374 = vrot.slane %v257, 1
      %v375 = vsel %vm337, %v373, %v374
      %v376 = vrot.slane %v258, 1
      %v377 = vsel %vm337, %v374, %v376
      %v378 = vrot.slane %v259, 1
      %v379 = vrot.slane %v260, 1
      %v380 = vsel %vm337, %v378, %v379
      %v381 = vrot.slane %v261, 1
      %v382 = vsel %vm337, %v379, %v381
      %v383 = vrot.slane %v262, 1
      %v384 = vrot.slane %v263, 1
      %v385 = vsel %vm337, %v383, %v384
      %v386 = vrot.slane %v264, 1
      %v387 = vsel %vm337, %v384, %v386
      %v388 = vrot.slane %v265, 1
      %v389 = vrot.slane %v266, 1
      %v390 = vsel %vm337, %v388, %v389
      %v391 = vrot.slane %v267, 1
      %v392 = vsel %vm337, %v389, %v391
      %v393 = vrot.slane %v268, 1
      %v394 = vrot.slane %v269, 1
      %v395 = vsel %vm337, %v393, %v394
      %v396 = vrot.slane %v270, 1
      %v397 = vsel %vm337, %v394, %v396
      %v398 = vrot.slane %v271, 1
      %v399 = vrot.slane %v272, 1
      %v400 = vsel %vm337, %v398, %v399
      %v401 = vrot.slane %v273, 1
      %v402 = vsel %vm337, %v399, %v401
      %v403 = vrot.slane %v274, 1
      %v404 = vrot.slane %v275, 1
      %v405 = vsel %vm337, %v403, %v404
      %v406 = vrot.slane %v276, 1
      %v407 = vsel %vm337, %v404, %v406
      %v408 = vrot.slane %v277, 1
      %v409 = vrot.slane %v278, 1
      %v410 = vsel %vm337, %v408, %v409
      %v411 = vrot.slane %v279, 1
      %v412 = vsel %vm337, %v409, %v411
      %v413 = vrot.slane %v280, 1
      %v414 = vrot.slane %v281, 1
      %v415 = vsel %vm337, %v413, %v414
      %v416 = vrot.slane %v282, 1
      %v417 = vsel %vm337, %v414, %v416
      %418 = vrot.lane.b32.xlu0 %v340, 4
      %v419 = vpop.permute.xlu0 %418
      %420 = vrot.lane.b32.xlu0 %v342, 4
      %v421 = vpop.permute.xlu0 %420
      %422 = vrot.lane.b32.xlu0 %v345, 4
      %v423 = vpop.permute.xlu0 %422
      %424 = vrot.lane.b32.xlu0 %v347, 4
      %v425 = vpop.permute.xlu0 %424
      %426 = vrot.lane.b32.xlu0 %v350, 4
      %v427 = vpop.permute.xlu0 %426
      %428 = vrot.lane.b32.xlu0 %v352, 4
      %v429 = vpop.permute.xlu0 %428
      %430 = vrot.lane.b32.xlu0 %v355, 4
      %v431 = vpop.permute.xlu0 %430
      %432 = vrot.lane.b32.xlu0 %v357, 4
      %v433 = vpop.permute.xlu0 %432
      %434 = vrot.lane.b32.xlu0 %v360, 4
      %v435 = vpop.permute.xlu0 %434
      %436 = vrot.lane.b32.xlu0 %v362, 4
      %v437 = vpop.permute.xlu0 %436
      %438 = vrot.lane.b32.xlu0 %v365, 4
      %v439 = vpop.permute.xlu0 %438
      %440 = vrot.lane.b32.xlu0 %v367, 4
      %v441 = vpop.permute.xlu0 %440
      %442 = vrot.lane.b32.xlu0 %v370, 4
      %v443 = vpop.permute.xlu0 %442
      %444 = vrot.lane.b32.xlu0 %v372, 4
      %v445 = vpop.permute.xlu0 %444
      %446 = vrot.lane.b32.xlu0 %v375, 4
      %v447 = vpop.permute.xlu0 %446
      %448 = vrot.lane.b32.xlu0 %v377, 4
      %v449 = vpop.permute.xlu0 %448
      %450 = vrot.lane.b32.xlu0 %v380, 4
      %v451 = vpop.permute.xlu0 %450
      %452 = vrot.lane.b32.xlu0 %v382, 4
      %v453 = vpop.permute.xlu0 %452
      %454 = vrot.lane.b32.xlu0 %v385, 4
      %v455 = vpop.permute.xlu0 %454
      %456 = vrot.lane.b32.xlu0 %v387, 4
      %v457 = vpop.permute.xlu0 %456
      %458 = vrot.lane.b32.xlu0 %v390, 4
      %v459 = vpop.permute.xlu0 %458
      %460 = vrot.lane.b32.xlu0 %v392, 4
      %v461 = vpop.permute.xlu0 %460
      %462 = vrot.lane.b32.xlu0 %v395, 4
      %v463 = vpop.permute.xlu0 %462
      %464 = vrot.lane.b32.xlu0 %v397, 4
      %v465 = vpop.permute.xlu0 %464
      %466 = vrot.lane.b32.xlu0 %v400, 4
      %v467 = vpop.permute.xlu0 %466
      %468 = vrot.lane.b32.xlu0 %v402, 4
      %v469 = vpop.permute.xlu0 %468
      %470 = vrot.lane.b32.xlu0 %v405, 4
      %v471 = vpop.permute.xlu0 %470
      %472 = vrot.lane.b32.xlu0 %v407, 4
      %v473 = vpop.permute.xlu0 %472
      %474 = vrot.lane.b32.xlu0 %v410, 4
      %v475 = vpop.permute.xlu0 %474
      %476 = vrot.lane.b32.xlu0 %v412, 4
      %v477 = vpop.permute.xlu0 %476
      %478 = vrot.lane.b32.xlu0 %v415, 4
      %v479 = vpop.permute.xlu0 %478
      %480 = vrot.lane.b32.xlu0 %v417, 4
      %v481 = vpop.permute.xlu0 %480
      %vm514 = vcmask 1045504
      %v515 = vrot.slane %v235, 2
      %v516 = vrot.slane %v236, 2
      %v517 = vsel %vm514, %v515, %v516
      %v518 = vrot.slane %v237, 2
      %v519 = vsel %vm514, %v516, %v518
      %v520 = vrot.slane %v238, 2
      %v521 = vrot.slane %v239, 2
      %v522 = vsel %vm514, %v520, %v521
      %v523 = vrot.slane %v240, 2
      %v524 = vsel %vm514, %v521, %v523
      %v525 = vrot.slane %v241, 2
      %v526 = vrot.slane %v242, 2
      %v527 = vsel %vm514, %v525, %v526
      %v528 = vrot.slane %v243, 2
      %v529 = vsel %vm514, %v526, %v528
      %v530 = vrot.slane %v244, 2
      %v531 = vrot.slane %v245, 2
      %v532 = vsel %vm514, %v530, %v531
      %v533 = vrot.slane %v246, 2
      %v534 = vsel %vm514, %v531, %v533
      %v535 = vrot.slane %v247, 2
      %v536 = vrot.slane %v248, 2
      %v537 = vsel %vm514, %v535, %v536
      %v538 = vrot.slane %v249, 2
      %v539 = vsel %vm514, %v536, %v538
      %v540 = vrot.slane %v250, 2
      %v541 = vrot.slane %v251, 2
      %v542 = vsel %vm514, %v540, %v541
      %v543 = vrot.slane %v252, 2
      %v544 = vsel %vm514, %v541, %v543
      %v545 = vrot.slane %v253, 2
      %v546 = vrot.slane %v254, 2
      %v547 = vsel %vm514, %v545, %v546
      %v548 = vrot.slane %v255, 2
      %v549 = vsel %vm514, %v546, %v548
      %v550 = vrot.slane %v256, 2
      %v551 = vrot.slane %v257, 2
      %v552 = vsel %vm514, %v550, %v551
      %v553 = vrot.slane %v258, 2
      %v554 = vsel %vm514, %v551, %v553
      %v555 = vrot.slane %v259, 2
      %v556 = vrot.slane %v260, 2
      %v557 = vsel %vm514, %v555, %v556
      %v558 = vrot.slane %v261, 2
      %v559 = vsel %vm514, %v556, %v558
      %v560 = vrot.slane %v262, 2
      %v561 = vrot.slane %v263, 2
      %v562 = vsel %vm514, %v560, %v561
      %v563 = vrot.slane %v264, 2
      %v564 = vsel %vm514, %v561, %v563
      %v565 = vrot.slane %v265, 2
      %v566 = vrot.slane %v266, 2
      %v567 = vsel %vm514, %v565, %v566
      %v568 = vrot.slane %v267, 2
      %v569 = vsel %vm514, %v566, %v568
      %v570 = vrot.slane %v268, 2
      %v571 = vrot.slane %v269, 2
      %v572 = vsel %vm514, %v570, %v571
      %v573 = vrot.slane %v270, 2
      %v574 = vsel %vm514, %v571, %v573
      %v575 = vrot.slane %v271, 2
      %v576 = vrot.slane %v272, 2
      %v577 = vsel %vm514, %v575, %v576
      %v578 = vrot.slane %v273, 2
      %v579 = vsel %vm514, %v576, %v578
      %v580 = vrot.slane %v274, 2
      %v581 = vrot.slane %v275, 2
      %v582 = vsel %vm514, %v580, %v581
      %v583 = vrot.slane %v276, 2
      %v584 = vsel %vm514, %v581, %v583
      %v585 = vrot.slane %v277, 2
      %v586 = vrot.slane %v278, 2
      %v587 = vsel %vm514, %v585, %v586
      %v588 = vrot.slane %v279, 2
      %v589 = vsel %vm514, %v586, %v588
      %v590 = vrot.slane %v280, 2
      %v591 = vrot.slane %v281, 2
      %v592 = vsel %vm514, %v590, %v591
      %v593 = vrot.slane %v282, 2
      %v594 = vsel %vm514, %v591, %v593
      %595 = vrot.lane.b32.xlu0 %v517, 8
      %v596 = vpop.permute.xlu0 %595
      %597 = vrot.lane.b32.xlu0 %v519, 8
      %v598 = vpop.permute.xlu0 %597
      %599 = vrot.lane.b32.xlu0 %v522, 8
      %v600 = vpop.permute.xlu0 %599
      %601 = vrot.lane.b32.xlu0 %v524, 8
      %v602 = vpop.permute.xlu0 %601
      %603 = vrot.lane.b32.xlu0 %v527, 8
      %v604 = vpop.permute.xlu0 %603
      %605 = vrot.lane.b32.xlu0 %v529, 8
      %v606 = vpop.permute.xlu0 %605
      %607 = vrot.lane.b32.xlu0 %v532, 8
      %v608 = vpop.permute.xlu0 %607
      %609 = vrot.lane.b32.xlu0 %v534, 8
      %v610 = vpop.permute.xlu0 %609
      %611 = vrot.lane.b32.xlu0 %v537, 8
      %v612 = vpop.permute.xlu0 %611
      %613 = vrot.lane.b32.xlu0 %v539, 8
      %v614 = vpop.permute.xlu0 %613
      %615 = vrot.lane.b32.xlu0 %v542, 8
      %v616 = vpop.permute.xlu0 %615
      %617 = vrot.lane.b32.xlu0 %v544, 8
      %v618 = vpop.permute.xlu0 %617
      %619 = vrot.lane.b32.xlu0 %v547, 8
      %v620 = vpop.permute.xlu0 %619
      %621 = vrot.lane.b32.xlu0 %v549, 8
      %v622 = vpop.permute.xlu0 %621
      %623 = vrot.lane.b32.xlu0 %v552, 8
      %v624 = vpop.permute.xlu0 %623
      %625 = vrot.lane.b32.xlu0 %v554, 8
      %v626 = vpop.permute.xlu0 %625
      %627 = vrot.lane.b32.xlu0 %v557, 8
      %v628 = vpop.permute.xlu0 %627
      %629 = vrot.lane.b32.xlu0 %v559, 8
      %v630 = vpop.permute.xlu0 %629
      %631 = vrot.lane.b32.xlu0 %v562, 8
      %v632 = vpop.permute.xlu0 %631
      %633 = vrot.lane.b32.xlu0 %v564, 8
      %v634 = vpop.permute.xlu0 %633
      %635 = vrot.lane.b32.xlu0 %v567, 8
      %v636 = vpop.permute.xlu0 %635
      %637 = vrot.lane.b32.xlu0 %v569, 8
      %v638 = vpop.permute.xlu0 %637
      %639 = vrot.lane.b32.xlu0 %v572, 8
      %v640 = vpop.permute.xlu0 %639
      %641 = vrot.lane.b32.xlu0 %v574, 8
      %v642 = vpop.permute.xlu0 %641
      %643 = vrot.lane.b32.xlu0 %v577, 8
      %v644 = vpop.permute.xlu0 %643
      %645 = vrot.lane.b32.xlu0 %v579, 8
      %v646 = vpop.permute.xlu0 %645
      %647 = vrot.lane.b32.xlu0 %v582, 8
      %v648 = vpop.permute.xlu0 %647
      %649 = vrot.lane.b32.xlu0 %v584, 8
      %v650 = vpop.permute.xlu0 %649
      %651 = vrot.lane.b32.xlu0 %v587, 8
      %v652 = vpop.permute.xlu0 %651
      %653 = vrot.lane.b32.xlu0 %v589, 8
      %v654 = vpop.permute.xlu0 %653
      %655 = vrot.lane.b32.xlu0 %v592, 8
      %v656 = vpop.permute.xlu0 %655
      %657 = vrot.lane.b32.xlu0 %v594, 8
      %v658 = vpop.permute.xlu0 %657
      %693 = vrot.lane.b32.xlu0 %v238, 12
      %v694 = vpop.permute.xlu0 %693
      %695 = vrot.lane.b32.xlu0 %v239, 12
      %v696 = vpop.permute.xlu0 %695
      %697 = vrot.lane.b32.xlu0 %v241, 12
      %v698 = vpop.permute.xlu0 %697
      %699 = vrot.lane.b32.xlu0 %v242, 12
      %v700 = vpop.permute.xlu0 %699
      %701 = vrot.lane.b32.xlu0 %v244, 12
      %v702 = vpop.permute.xlu0 %701
      %703 = vrot.lane.b32.xlu0 %v245, 12
      %v704 = vpop.permute.xlu0 %703
      %705 = vrot.lane.b32.xlu0 %v247, 12
      %v706 = vpop.permute.xlu0 %705
      %707 = vrot.lane.b32.xlu0 %v248, 12
      %v708 = vpop.permute.xlu0 %707
      %709 = vrot.lane.b32.xlu0 %v250, 12
      %v710 = vpop.permute.xlu0 %709
      %711 = vrot.lane.b32.xlu0 %v251, 12
      %v712 = vpop.permute.xlu0 %711
      %713 = vrot.lane.b32.xlu0 %v253, 12
      %v714 = vpop.permute.xlu0 %713
      %715 = vrot.lane.b32.xlu0 %v254, 12
      %v716 = vpop.permute.xlu0 %715
      %717 = vrot.lane.b32.xlu0 %v256, 12
      %v718 = vpop.permute.xlu0 %717
      %719 = vrot.lane.b32.xlu0 %v257, 12
      %v720 = vpop.permute.xlu0 %719
      %721 = vrot.lane.b32.xlu0 %v259, 12
      %v722 = vpop.permute.xlu0 %721
      %723 = vrot.lane.b32.xlu0 %v260, 12
      %v724 = vpop.permute.xlu0 %723
      %725 = vrot.lane.b32.xlu0 %v262, 12
      %v726 = vpop.permute.xlu0 %725
      %727 = vrot.lane.b32.xlu0 %v263, 12
      %v728 = vpop.permute.xlu0 %727
      %729 = vrot.lane.b32.xlu0 %v265, 12
      %v730 = vpop.permute.xlu0 %729
      %731 = vrot.lane.b32.xlu0 %v266, 12
      %v732 = vpop.permute.xlu0 %731
      %733 = vrot.lane.b32.xlu0 %v268, 12
      %v734 = vpop.permute.xlu0 %733
      %735 = vrot.lane.b32.xlu0 %v269, 12
      %v736 = vpop.permute.xlu0 %735
      %737 = vrot.lane.b32.xlu0 %v271, 12
      %v738 = vpop.permute.xlu0 %737
      %739 = vrot.lane.b32.xlu0 %v272, 12
      %v740 = vpop.permute.xlu0 %739
      %741 = vrot.lane.b32.xlu0 %v274, 12
      %v742 = vpop.permute.xlu0 %741
      %743 = vrot.lane.b32.xlu0 %v275, 12
      %v744 = vpop.permute.xlu0 %743
      %745 = vrot.lane.b32.xlu0 %v277, 12
      %v746 = vpop.permute.xlu0 %745
      %747 = vrot.lane.b32.xlu0 %v278, 12
      %v748 = vpop.permute.xlu0 %747
      %749 = vrot.lane.b32.xlu0 %v280, 12
      %v750 = vpop.permute.xlu0 %749
      %751 = vrot.lane.b32.xlu0 %v281, 12
      %v752 = vpop.permute.xlu0 %751
      %753 = vrot.lane.b32.xlu0 %v283, 12
      %v754 = vpop.permute.xlu0 %753
      %755 = vrot.lane.b32.xlu0 %v284, 12
      %v756 = vpop.permute.xlu0 %755
      %v790 = vrot.slane %v283, 1
      %v791 = vrot.slane %v284, 1
      %v792 = vsel %vm337, %v790, %v791
      %v793 = vrot.slane %v285, 1
      %v794 = vsel %vm337, %v791, %v793
      %795 = vrot.lane.b32.xlu0 %v345, 16
      %v796 = vpop.permute.xlu0 %795
      %797 = vrot.lane.b32.xlu0 %v347, 16
      %v798 = vpop.permute.xlu0 %797
      %799 = vrot.lane.b32.xlu0 %v350, 16
      %v800 = vpop.permute.xlu0 %799
      %801 = vrot.lane.b32.xlu0 %v352, 16
      %v802 = vpop.permute.xlu0 %801
      %803 = vrot.lane.b32.xlu0 %v355, 16
      %v804 = vpop.permute.xlu0 %803
      %805 = vrot.lane.b32.xlu0 %v357, 16
      %v806 = vpop.permute.xlu0 %805
      %807 = vrot.lane.b32.xlu0 %v360, 16
      %v808 = vpop.permute.xlu0 %807
      %809 = vrot.lane.b32.xlu0 %v362, 16
      %v810 = vpop.permute.xlu0 %809
      %811 = vrot.lane.b32.xlu0 %v365, 16
      %v812 = vpop.permute.xlu0 %811
      %813 = vrot.lane.b32.xlu0 %v367, 16
      %v814 = vpop.permute.xlu0 %813
      %815 = vrot.lane.b32.xlu0 %v370, 16
      %v816 = vpop.permute.xlu0 %815
      %817 = vrot.lane.b32.xlu0 %v372, 16
      %v818 = vpop.permute.xlu0 %817
      %819 = vrot.lane.b32.xlu0 %v375, 16
      %v820 = vpop.permute.xlu0 %819
      %821 = vrot.lane.b32.xlu0 %v377, 16
      %v822 = vpop.permute.xlu0 %821
      %823 = vrot.lane.b32.xlu0 %v380, 16
      %v824 = vpop.permute.xlu0 %823
      %825 = vrot.lane.b32.xlu0 %v382, 16
      %v826 = vpop.permute.xlu0 %825
      %827 = vrot.lane.b32.xlu0 %v385, 16
      %v828 = vpop.permute.xlu0 %827
      %829 = vrot.lane.b32.xlu0 %v387, 16
      %v830 = vpop.permute.xlu0 %829
      %831 = vrot.lane.b32.xlu0 %v390, 16
      %v832 = vpop.permute.xlu0 %831
      %833 = vrot.lane.b32.xlu0 %v392, 16
      %v834 = vpop.permute.xlu0 %833
      %835 = vrot.lane.b32.xlu0 %v395, 16
      %v836 = vpop.permute.xlu0 %835
      %837 = vrot.lane.b32.xlu0 %v397, 16
      %v838 = vpop.permute.xlu0 %837
      %839 = vrot.lane.b32.xlu0 %v400, 16
      %v840 = vpop.permute.xlu0 %839
      %841 = vrot.lane.b32.xlu0 %v402, 16
      %v842 = vpop.permute.xlu0 %841
      %843 = vrot.lane.b32.xlu0 %v405, 16
      %v844 = vpop.permute.xlu0 %843
      %845 = vrot.lane.b32.xlu0 %v407, 16
      %v846 = vpop.permute.xlu0 %845
      %847 = vrot.lane.b32.xlu0 %v410, 16
      %v848 = vpop.permute.xlu0 %847
      %849 = vrot.lane.b32.xlu0 %v412, 16
      %v850 = vpop.permute.xlu0 %849
      %851 = vrot.lane.b32.xlu0 %v415, 16
      %v852 = vpop.permute.xlu0 %851
      %853 = vrot.lane.b32.xlu0 %v417, 16
      %v854 = vpop.permute.xlu0 %853
      %855 = vrot.lane.b32.xlu0 %v792, 16
      %v856 = vpop.permute.xlu0 %855
      %857 = vrot.lane.b32.xlu0 %v794, 16
      %v858 = vpop.permute.xlu0 %857
      %v891 = vrot.slane %v283, 2
      %v892 = vrot.slane %v284, 2
      %v893 = vsel %vm514, %v891, %v892
      %v894 = vrot.slane %v285, 2
      %v895 = vsel %vm514, %v892, %v894
      %896 = vrot.lane.b32.xlu0 %v522, 20
      %v897 = vpop.permute.xlu0 %896
      %898 = vrot.lane.b32.xlu0 %v524, 20
      %v899 = vpop.permute.xlu0 %898
      %900 = vrot.lane.b32.xlu0 %v527, 20
      %v901 = vpop.permute.xlu0 %900
      %902 = vrot.lane.b32.xlu0 %v529, 20
      %v903 = vpop.permute.xlu0 %902
      %904 = vrot.lane.b32.xlu0 %v532, 20
      %v905 = vpop.permute.xlu0 %904
      %906 = vrot.lane.b32.xlu0 %v534, 20
      %v907 = vpop.permute.xlu0 %906
      %908 = vrot.lane.b32.xlu0 %v537, 20
      %v909 = vpop.permute.xlu0 %908
      %910 = vrot.lane.b32.xlu0 %v539, 20
      %v911 = vpop.permute.xlu0 %910
      %912 = vrot.lane.b32.xlu0 %v542, 20
      %v913 = vpop.permute.xlu0 %912
      %914 = vrot.lane.b32.xlu0 %v544, 20
      %v915 = vpop.permute.xlu0 %914
      %916 = vrot.lane.b32.xlu0 %v547, 20
      %v917 = vpop.permute.xlu0 %916
      %918 = vrot.lane.b32.xlu0 %v549, 20
      %v919 = vpop.permute.xlu0 %918
      %920 = vrot.lane.b32.xlu0 %v552, 20
      %v921 = vpop.permute.xlu0 %920
      %922 = vrot.lane.b32.xlu0 %v554, 20
      %v923 = vpop.permute.xlu0 %922
      %924 = vrot.lane.b32.xlu0 %v557, 20
      %v925 = vpop.permute.xlu0 %924
      %926 = vrot.lane.b32.xlu0 %v559, 20
      %v927 = vpop.permute.xlu0 %926
      %928 = vrot.lane.b32.xlu0 %v562, 20
      %v929 = vpop.permute.xlu0 %928
      %930 = vrot.lane.b32.xlu0 %v564, 20
      %v931 = vpop.permute.xlu0 %930
      %932 = vrot.lane.b32.xlu0 %v567, 20
      %v933 = vpop.permute.xlu0 %932
      %934 = vrot.lane.b32.xlu0 %v569, 20
      %v935 = vpop.permute.xlu0 %934
      %936 = vrot.lane.b32.xlu0 %v572, 20
      %v937 = vpop.permute.xlu0 %936
      %938 = vrot.lane.b32.xlu0 %v574, 20
      %v939 = vpop.permute.xlu0 %938
      %940 = vrot.lane.b32.xlu0 %v577, 20
      %v941 = vpop.permute.xlu0 %940
      %942 = vrot.lane.b32.xlu0 %v579, 20
      %v943 = vpop.permute.xlu0 %942
      %944 = vrot.lane.b32.xlu0 %v582, 20
      %v945 = vpop.permute.xlu0 %944
      %946 = vrot.lane.b32.xlu0 %v584, 20
      %v947 = vpop.permute.xlu0 %946
      %948 = vrot.lane.b32.xlu0 %v587, 20
      %v949 = vpop.permute.xlu0 %948
      %950 = vrot.lane.b32.xlu0 %v589, 20
      %v951 = vpop.permute.xlu0 %950
      %952 = vrot.lane.b32.xlu0 %v592, 20
      %v953 = vpop.permute.xlu0 %952
      %954 = vrot.lane.b32.xlu0 %v594, 20
      %v955 = vpop.permute.xlu0 %954
      %956 = vrot.lane.b32.xlu0 %v893, 20
      %v957 = vpop.permute.xlu0 %956
      %958 = vrot.lane.b32.xlu0 %v895, 20
      %v959 = vpop.permute.xlu0 %958
      %994 = vrot.lane.b32.xlu0 %v241, 24
      %v995 = vpop.permute.xlu0 %994
      %996 = vrot.lane.b32.xlu0 %v242, 24
      %v997 = vpop.permute.xlu0 %996
      %998 = vrot.lane.b32.xlu0 %v244, 24
      %v999 = vpop.permute.xlu0 %998
      %1000 = vrot.lane.b32.xlu0 %v245, 24
      %v1001 = vpop.permute.xlu0 %1000
      %1002 = vrot.lane.b32.xlu0 %v247, 24
      %v1003 = vpop.permute.xlu0 %1002
      %1004 = vrot.lane.b32.xlu0 %v248, 24
      %v1005 = vpop.permute.xlu0 %1004
      %1006 = vrot.lane.b32.xlu0 %v250, 24
      %v1007 = vpop.permute.xlu0 %1006
      %1008 = vrot.lane.b32.xlu0 %v251, 24
      %v1009 = vpop.permute.xlu0 %1008
      %1010 = vrot.lane.b32.xlu0 %v253, 24
      %v1011 = vpop.permute.xlu0 %1010
      %1012 = vrot.lane.b32.xlu0 %v254, 24
      %v1013 = vpop.permute.xlu0 %1012
      %1014 = vrot.lane.b32.xlu0 %v256, 24
      %v1015 = vpop.permute.xlu0 %1014
      %1016 = vrot.lane.b32.xlu0 %v257, 24
      %v1017 = vpop.permute.xlu0 %1016
      %1018 = vrot.lane.b32.xlu0 %v259, 24
      %v1019 = vpop.permute.xlu0 %1018
      %1020 = vrot.lane.b32.xlu0 %v260, 24
      %v1021 = vpop.permute.xlu0 %1020
      %1022 = vrot.lane.b32.xlu0 %v262, 24
      %v1023 = vpop.permute.xlu0 %1022
      %1024 = vrot.lane.b32.xlu0 %v263, 24
      %v1025 = vpop.permute.xlu0 %1024
      %1026 = vrot.lane.b32.xlu0 %v265, 24
      %v1027 = vpop.permute.xlu0 %1026
      %1028 = vrot.lane.b32.xlu0 %v266, 24
      %v1029 = vpop.permute.xlu0 %1028
      %1030 = vrot.lane.b32.xlu0 %v268, 24
      %v1031 = vpop.permute.xlu0 %1030
      %1032 = vrot.lane.b32.xlu0 %v269, 24
      %v1033 = vpop.permute.xlu0 %1032
      %1034 = vrot.lane.b32.xlu0 %v271, 24
      %v1035 = vpop.permute.xlu0 %1034
      %1036 = vrot.lane.b32.xlu0 %v272, 24
      %v1037 = vpop.permute.xlu0 %1036
      %1038 = vrot.lane.b32.xlu0 %v274, 24
      %v1039 = vpop.permute.xlu0 %1038
      %1040 = vrot.lane.b32.xlu0 %v275, 24
      %v1041 = vpop.permute.xlu0 %1040
      %1042 = vrot.lane.b32.xlu0 %v277, 24
      %v1043 = vpop.permute.xlu0 %1042
      %1044 = vrot.lane.b32.xlu0 %v278, 24
      %v1045 = vpop.permute.xlu0 %1044
      %1046 = vrot.lane.b32.xlu0 %v280, 24
      %v1047 = vpop.permute.xlu0 %1046
      %1048 = vrot.lane.b32.xlu0 %v281, 24
      %v1049 = vpop.permute.xlu0 %1048
      %1050 = vrot.lane.b32.xlu0 %v283, 24
      %v1051 = vpop.permute.xlu0 %1050
      %1052 = vrot.lane.b32.xlu0 %v284, 24
      %v1053 = vpop.permute.xlu0 %1052
      %1054 = vrot.lane.b32.xlu0 %v286, 24
      %v1055 = vpop.permute.xlu0 %1054
      %1056 = vrot.lane.b32.xlu0 %v287, 24
      %v1057 = vpop.permute.xlu0 %1056
      %v1091 = vrot.slane %v286, 1
      %v1092 = vrot.slane %v287, 1
      %v1093 = vsel %vm337, %v1091, %v1092
      %v1094 = vrot.slane %v288, 1
      %v1095 = vsel %vm337, %v1092, %v1094
      %1096 = vrot.lane.b32.xlu0 %v350, 28
      %v1097 = vpop.permute.xlu0 %1096
      %1098 = vrot.lane.b32.xlu0 %v352, 28
      %v1099 = vpop.permute.xlu0 %1098
      %1100 = vrot.lane.b32.xlu0 %v355, 28
      %v1101 = vpop.permute.xlu0 %1100
      %1102 = vrot.lane.b32.xlu0 %v357, 28
      %v1103 = vpop.permute.xlu0 %1102
      %1104 = vrot.lane.b32.xlu0 %v360, 28
      %v1105 = vpop.permute.xlu0 %1104
      %1106 = vrot.lane.b32.xlu0 %v362, 28
      %v1107 = vpop.permute.xlu0 %1106
      %1108 = vrot.lane.b32.xlu0 %v365, 28
      %v1109 = vpop.permute.xlu0 %1108
      %1110 = vrot.lane.b32.xlu0 %v367, 28
      %v1111 = vpop.permute.xlu0 %1110
      %1112 = vrot.lane.b32.xlu0 %v370, 28
      %v1113 = vpop.permute.xlu0 %1112
      %1114 = vrot.lane.b32.xlu0 %v372, 28
      %v1115 = vpop.permute.xlu0 %1114
      %1116 = vrot.lane.b32.xlu0 %v375, 28
      %v1117 = vpop.permute.xlu0 %1116
      %1118 = vrot.lane.b32.xlu0 %v377, 28
      %v1119 = vpop.permute.xlu0 %1118
      %1120 = vrot.lane.b32.xlu0 %v380, 28
      %v1121 = vpop.permute.xlu0 %1120
      %1122 = vrot.lane.b32.xlu0 %v382, 28
      %v1123 = vpop.permute.xlu0 %1122
      %1124 = vrot.lane.b32.xlu0 %v385, 28
      %v1125 = vpop.permute.xlu0 %1124
      %1126 = vrot.lane.b32.xlu0 %v387, 28
      %v1127 = vpop.permute.xlu0 %1126
      %1128 = vrot.lane.b32.xlu0 %v390, 28
      %v1129 = vpop.permute.xlu0 %1128
      %1130 = vrot.lane.b32.xlu0 %v392, 28
      %v1131 = vpop.permute.xlu0 %1130
      %1132 = vrot.lane.b32.xlu0 %v395, 28
      %v1133 = vpop.permute.xlu0 %1132
      %1134 = vrot.lane.b32.xlu0 %v397, 28
      %v1135 = vpop.permute.xlu0 %1134
      %1136 = vrot.lane.b32.xlu0 %v400, 28
      %v1137 = vpop.permute.xlu0 %1136
      %1138 = vrot.lane.b32.xlu0 %v402, 28
      %v1139 = vpop.permute.xlu0 %1138
      %1140 = vrot.lane.b32.xlu0 %v405, 28
      %v1141 = vpop.permute.xlu0 %1140
      %1142 = vrot.lane.b32.xlu0 %v407, 28
      %v1143 = vpop.permute.xlu0 %1142
      %1144 = vrot.lane.b32.xlu0 %v410, 28
      %v1145 = vpop.permute.xlu0 %1144
      %1146 = vrot.lane.b32.xlu0 %v412, 28
      %v1147 = vpop.permute.xlu0 %1146
      %1148 = vrot.lane.b32.xlu0 %v415, 28
      %v1149 = vpop.permute.xlu0 %1148
      %1150 = vrot.lane.b32.xlu0 %v417, 28
      %v1151 = vpop.permute.xlu0 %1150
      %1152 = vrot.lane.b32.xlu0 %v792, 28
      %v1153 = vpop.permute.xlu0 %1152
      %1154 = vrot.lane.b32.xlu0 %v794, 28
      %v1155 = vpop.permute.xlu0 %1154
      %1156 = vrot.lane.b32.xlu0 %v1093, 28
      %v1157 = vpop.permute.xlu0 %1156
      %1158 = vrot.lane.b32.xlu0 %v1095, 28
      %v1159 = vpop.permute.xlu0 %1158
      %v1192 = vrot.slane %v286, 2
      %v1193 = vrot.slane %v287, 2
      %v1194 = vsel %vm514, %v1192, %v1193
      %v1195 = vrot.slane %v288, 2
      %v1196 = vsel %vm514, %v1193, %v1195
      %1197 = vrot.lane.b32.xlu0 %v527, 32
      %v1198 = vpop.permute.xlu0 %1197
      %1199 = vrot.lane.b32.xlu0 %v529, 32
      %v1200 = vpop.permute.xlu0 %1199
      %1201 = vrot.lane.b32.xlu0 %v532, 32
      %v1202 = vpop.permute.xlu0 %1201
      %1203 = vrot.lane.b32.xlu0 %v534, 32
      %v1204 = vpop.permute.xlu0 %1203
      %1205 = vrot.lane.b32.xlu0 %v537, 32
      %v1206 = vpop.permute.xlu0 %1205
      %1207 = vrot.lane.b32.xlu0 %v539, 32
      %v1208 = vpop.permute.xlu0 %1207
      %1209 = vrot.lane.b32.xlu0 %v542, 32
      %v1210 = vpop.permute.xlu0 %1209
      %1211 = vrot.lane.b32.xlu0 %v544, 32
      %v1212 = vpop.permute.xlu0 %1211
      %1213 = vrot.lane.b32.xlu0 %v547, 32
      %v1214 = vpop.permute.xlu0 %1213
      %1215 = vrot.lane.b32.xlu0 %v549, 32
      %v1216 = vpop.permute.xlu0 %1215
      %1217 = vrot.lane.b32.xlu0 %v552, 32
      %v1218 = vpop.permute.xlu0 %1217
      %1219 = vrot.lane.b32.xlu0 %v554, 32
      %v1220 = vpop.permute.xlu0 %1219
      %1221 = vrot.lane.b32.xlu0 %v557, 32
      %v1222 = vpop.permute.xlu0 %1221
      %1223 = vrot.lane.b32.xlu0 %v559, 32
      %v1224 = vpop.permute.xlu0 %1223
      %1225 = vrot.lane.b32.xlu0 %v562, 32
      %v1226 = vpop.permute.xlu0 %1225
      %1227 = vrot.lane.b32.xlu0 %v564, 32
      %v1228 = vpop.permute.xlu0 %1227
      %1229 = vrot.lane.b32.xlu0 %v567, 32
      %v1230 = vpop.permute.xlu0 %1229
      %1231 = vrot.lane.b32.xlu0 %v569, 32
      %v1232 = vpop.permute.xlu0 %1231
      %1233 = vrot.lane.b32.xlu0 %v572, 32
      %v1234 = vpop.permute.xlu0 %1233
      %1235 = vrot.lane.b32.xlu0 %v574, 32
      %v1236 = vpop.permute.xlu0 %1235
      %1237 = vrot.lane.b32.xlu0 %v577, 32
      %v1238 = vpop.permute.xlu0 %1237
      %1239 = vrot.lane.b32.xlu0 %v579, 32
      %v1240 = vpop.permute.xlu0 %1239
      %1241 = vrot.lane.b32.xlu0 %v582, 32
      %v1242 = vpop.permute.xlu0 %1241
      %1243 = vrot.lane.b32.xlu0 %v584, 32
      %v1244 = vpop.permute.xlu0 %1243
      %1245 = vrot.lane.b32.xlu0 %v587, 32
      %v1246 = vpop.permute.xlu0 %1245
      %1247 = vrot.lane.b32.xlu0 %v589, 32
      %v1248 = vpop.permute.xlu0 %1247
      %1249 = vrot.lane.b32.xlu0 %v592, 32
      %v1250 = vpop.permute.xlu0 %1249
      %1251 = vrot.lane.b32.xlu0 %v594, 32
      %v1252 = vpop.permute.xlu0 %1251
      %1253 = vrot.lane.b32.xlu0 %v893, 32
      %v1254 = vpop.permute.xlu0 %1253
      %1255 = vrot.lane.b32.xlu0 %v895, 32
      %v1256 = vpop.permute.xlu0 %1255
      %1257 = vrot.lane.b32.xlu0 %v1194, 32
      %v1258 = vpop.permute.xlu0 %1257
      %1259 = vrot.lane.b32.xlu0 %v1196, 32
      %v1260 = vpop.permute.xlu0 %1259
      %vm1293 = vcmask 31744
      %v1294 = vsel %vm1293, %v235, %v419
      %v1295 = vsel %vm1293, %v236, %v421
      %v1296 = vsel %vm1293, %v238, %v423
      %v1297 = vsel %vm1293, %v239, %v425
      %v1298 = vsel %vm1293, %v241, %v427
      %v1299 = vsel %vm1293, %v242, %v429
      %v1300 = vsel %vm1293, %v244, %v431
      %v1301 = vsel %vm1293, %v245, %v433
      %v1302 = vsel %vm1293, %v247, %v435
      %v1303 = vsel %vm1293, %v248, %v437
      %v1304 = vsel %vm1293, %v250, %v439
      %v1305 = vsel %vm1293, %v251, %v441
      %v1306 = vsel %vm1293, %v253, %v443
      %v1307 = vsel %vm1293, %v254, %v445
      %v1308 = vsel %vm1293, %v256, %v447
      %v1309 = vsel %vm1293, %v257, %v449
      %v1310 = vsel %vm1293, %v259, %v451
      %v1311 = vsel %vm1293, %v260, %v453
      %v1312 = vsel %vm1293, %v262, %v455
      %v1313 = vsel %vm1293, %v263, %v457
      %v1314 = vsel %vm1293, %v265, %v459
      %v1315 = vsel %vm1293, %v266, %v461
      %v1316 = vsel %vm1293, %v268, %v463
      %v1317 = vsel %vm1293, %v269, %v465
      %v1318 = vsel %vm1293, %v271, %v467
      %v1319 = vsel %vm1293, %v272, %v469
      %v1320 = vsel %vm1293, %v274, %v471
      %v1321 = vsel %vm1293, %v275, %v473
      %v1322 = vsel %vm1293, %v277, %v475
      %v1323 = vsel %vm1293, %v278, %v477
      %v1324 = vsel %vm1293, %v280, %v479
      %v1325 = vsel %vm1293, %v281, %v481
      %vm1326 = vcmask 64512
      %v1327 = vsel %vm1326, %v1294, %v596
      %v1328 = vsel %vm1326, %v1295, %v598
      %v1329 = vsel %vm1326, %v1296, %v600
      %v1330 = vsel %vm1326, %v1297, %v602
      %v1331 = vsel %vm1326, %v1298, %v604
      %v1332 = vsel %vm1326, %v1299, %v606
      %v1333 = vsel %vm1326, %v1300, %v608
      %v1334 = vsel %vm1326, %v1301, %v610
      %v1335 = vsel %vm1326, %v1302, %v612
      %v1336 = vsel %vm1326, %v1303, %v614
      %v1337 = vsel %vm1326, %v1304, %v616
      %v1338 = vsel %vm1326, %v1305, %v618
      %v1339 = vsel %vm1326, %v1306, %v620
      %v1340 = vsel %vm1326, %v1307, %v622
      %v1341 = vsel %vm1326, %v1308, %v624
      %v1342 = vsel %vm1326, %v1309, %v626
      %v1343 = vsel %vm1326, %v1310, %v628
      %v1344 = vsel %vm1326, %v1311, %v630
      %v1345 = vsel %vm1326, %v1312, %v632
      %v1346 = vsel %vm1326, %v1313, %v634
      %v1347 = vsel %vm1326, %v1314, %v636
      %v1348 = vsel %vm1326, %v1315, %v638
      %v1349 = vsel %vm1326, %v1316, %v640
      %v1350 = vsel %vm1326, %v1317, %v642
      %v1351 = vsel %vm1326, %v1318, %v644
      %v1352 = vsel %vm1326, %v1319, %v646
      %v1353 = vsel %vm1326, %v1320, %v648
      %v1354 = vsel %vm1326, %v1321, %v650
      %v1355 = vsel %vm1326, %v1322, %v652
      %v1356 = vsel %vm1326, %v1323, %v654
      %v1357 = vsel %vm1326, %v1324, %v656
      %v1358 = vsel %vm1326, %v1325, %v658
      %vm1359 = vcmask 97280
      %v1360 = vsel %vm1359, %v1327, %v694
      %v1361 = vsel %vm1359, %v1328, %v696
      %v1362 = vsel %vm1359, %v1329, %v698
      %v1363 = vsel %vm1359, %v1330, %v700
      %v1364 = vsel %vm1359, %v1331, %v702
      %v1365 = vsel %vm1359, %v1332, %v704
      %v1366 = vsel %vm1359, %v1333, %v706
      %v1367 = vsel %vm1359, %v1334, %v708
      %v1368 = vsel %vm1359, %v1335, %v710
      %v1369 = vsel %vm1359, %v1336, %v712
      %v1370 = vsel %vm1359, %v1337, %v714
      %v1371 = vsel %vm1359, %v1338, %v716
      %v1372 = vsel %vm1359, %v1339, %v718
      %v1373 = vsel %vm1359, %v1340, %v720
      %v1374 = vsel %vm1359, %v1341, %v722
      %v1375 = vsel %vm1359, %v1342, %v724
      %v1376 = vsel %vm1359, %v1343, %v726
      %v1377 = vsel %vm1359, %v1344, %v728
      %v1378 = vsel %vm1359, %v1345, %v730
      %v1379 = vsel %vm1359, %v1346, %v732
      %v1380 = vsel %vm1359, %v1347, %v734
      %v1381 = vsel %vm1359, %v1348, %v736
      %v1382 = vsel %vm1359, %v1349, %v738
      %v1383 = vsel %vm1359, %v1350, %v740
      %v1384 = vsel %vm1359, %v1351, %v742
      %v1385 = vsel %vm1359, %v1352, %v744
      %v1386 = vsel %vm1359, %v1353, %v746
      %v1387 = vsel %vm1359, %v1354, %v748
      %v1388 = vsel %vm1359, %v1355, %v750
      %v1389 = vsel %vm1359, %v1356, %v752
      %v1390 = vsel %vm1359, %v1357, %v754
      %v1391 = vsel %vm1359, %v1358, %v756
      %vm1392 = vcmask 130048
      %v1393 = vsel %vm1392, %v1360, %v796
      %v1394 = vsel %vm1392, %v1361, %v798
      %v1395 = vsel %vm1392, %v1362, %v800
      %v1396 = vsel %vm1392, %v1363, %v802
      %v1397 = vsel %vm1392, %v1364, %v804
      %v1398 = vsel %vm1392, %v1365, %v806
      %v1399 = vsel %vm1392, %v1366, %v808
      %v1400 = vsel %vm1392, %v1367, %v810
      %v1401 = vsel %vm1392, %v1368, %v812
      %v1402 = vsel %vm1392, %v1369, %v814
      %v1403 = vsel %vm1392, %v1370, %v816
      %v1404 = vsel %vm1392, %v1371, %v818
      %v1405 = vsel %vm1392, %v1372, %v820
      %v1406 = vsel %vm1392, %v1373, %v822
      %v1407 = vsel %vm1392, %v1374, %v824
      %v1408 = vsel %vm1392, %v1375, %v826
      %v1409 = vsel %vm1392, %v1376, %v828
      %v1410 = vsel %vm1392, %v1377, %v830
      %v1411 = vsel %vm1392, %v1378, %v832
      %v1412 = vsel %vm1392, %v1379, %v834
      %v1413 = vsel %vm1392, %v1380, %v836
      %v1414 = vsel %vm1392, %v1381, %v838
      %v1415 = vsel %vm1392, %v1382, %v840
      %v1416 = vsel %vm1392, %v1383, %v842
      %v1417 = vsel %vm1392, %v1384, %v844
      %v1418 = vsel %vm1392, %v1385, %v846
      %v1419 = vsel %vm1392, %v1386, %v848
      %v1420 = vsel %vm1392, %v1387, %v850
      %v1421 = vsel %vm1392, %v1388, %v852
      %v1422 = vsel %vm1392, %v1389, %v854
      %v1423 = vsel %vm1392, %v1390, %v856
      %v1424 = vsel %vm1392, %v1391, %v858
      %vm1425 = vcmask 162816
      %v1426 = vsel %vm1425, %v1393, %v897
      %v1427 = vsel %vm1425, %v1394, %v899
      %v1428 = vsel %vm1425, %v1395, %v901
      %v1429 = vsel %vm1425, %v1396, %v903
      %v1430 = vsel %vm1425, %v1397, %v905
      %v1431 = vsel %vm1425, %v1398, %v907
      %v1432 = vsel %vm1425, %v1399, %v909
      %v1433 = vsel %vm1425, %v1400, %v911
      %v1434 = vsel %vm1425, %v1401, %v913
      %v1435 = vsel %vm1425, %v1402, %v915
      %v1436 = vsel %vm1425, %v1403, %v917
      %v1437 = vsel %vm1425, %v1404, %v919
      %v1438 = vsel %vm1425, %v1405, %v921
      %v1439 = vsel %vm1425, %v1406, %v923
      %v1440 = vsel %vm1425, %v1407, %v925
      %v1441 = vsel %vm1425, %v1408, %v927
      %v1442 = vsel %vm1425, %v1409, %v929
      %v1443 = vsel %vm1425, %v1410, %v931
      %v1444 = vsel %vm1425, %v1411, %v933
      %v1445 = vsel %vm1425, %v1412, %v935
      %v1446 = vsel %vm1425, %v1413, %v937
      %v1447 = vsel %vm1425, %v1414, %v939
      %v1448 = vsel %vm1425, %v1415, %v941
      %v1449 = vsel %vm1425, %v1416, %v943
      %v1450 = vsel %vm1425, %v1417, %v945
      %v1451 = vsel %vm1425, %v1418, %v947
      %v1452 = vsel %vm1425, %v1419, %v949
      %v1453 = vsel %vm1425, %v1420, %v951
      %v1454 = vsel %vm1425, %v1421, %v953
      %v1455 = vsel %vm1425, %v1422, %v955
      %v1456 = vsel %vm1425, %v1423, %v957
      %v1457 = vsel %vm1425, %v1424, %v959
      %vm1458 = vcmask 195584
      %v1459 = vsel %vm1458, %v1426, %v995
      %v1460 = vsel %vm1458, %v1427, %v997
      %v1461 = vsel %vm1458, %v1428, %v999
      %v1462 = vsel %vm1458, %v1429, %v1001
      %v1463 = vsel %vm1458, %v1430, %v1003
      %v1464 = vsel %vm1458, %v1431, %v1005
      %v1465 = vsel %vm1458, %v1432, %v1007
      %v1466 = vsel %vm1458, %v1433, %v1009
      %v1467 = vsel %vm1458, %v1434, %v1011
      %v1468 = vsel %vm1458, %v1435, %v1013
      %v1469 = vsel %vm1458, %v1436, %v1015
      %v1470 = vsel %vm1458, %v1437, %v1017
      %v1471 = vsel %vm1458, %v1438, %v1019
      %v1472 = vsel %vm1458, %v1439, %v1021
      %v1473 = vsel %vm1458, %v1440, %v1023
      %v1474 = vsel %vm1458, %v1441, %v1025
      %v1475 = vsel %vm1458, %v1442, %v1027
      %v1476 = vsel %vm1458, %v1443, %v1029
      %v1477 = vsel %vm1458, %v1444, %v1031
      %v1478 = vsel %vm1458, %v1445, %v1033
      %v1479 = vsel %vm1458, %v1446, %v1035
      %v1480 = vsel %vm1458, %v1447, %v1037
      %v1481 = vsel %vm1458, %v1448, %v1039
      %v1482 = vsel %vm1458, %v1449, %v1041
      %v1483 = vsel %vm1458, %v1450, %v1043
      %v1484 = vsel %vm1458, %v1451, %v1045
      %v1485 = vsel %vm1458, %v1452, %v1047
      %v1486 = vsel %vm1458, %v1453, %v1049
      %v1487 = vsel %vm1458, %v1454, %v1051
      %v1488 = vsel %vm1458, %v1455, %v1053
      %v1489 = vsel %vm1458, %v1456, %v1055
      %v1490 = vsel %vm1458, %v1457, %v1057
      %vm1491 = vcmask 228352
      %v1492 = vsel %vm1491, %v1459, %v1097
      %v1493 = vsel %vm1491, %v1460, %v1099
      %v1494 = vsel %vm1491, %v1461, %v1101
      %v1495 = vsel %vm1491, %v1462, %v1103
      %v1496 = vsel %vm1491, %v1463, %v1105
      %v1497 = vsel %vm1491, %v1464, %v1107
      %v1498 = vsel %vm1491, %v1465, %v1109
      %v1499 = vsel %vm1491, %v1466, %v1111
      %v1500 = vsel %vm1491, %v1467, %v1113
      %v1501 = vsel %vm1491, %v1468, %v1115
      %v1502 = vsel %vm1491, %v1469, %v1117
      %v1503 = vsel %vm1491, %v1470, %v1119
      %v1504 = vsel %vm1491, %v1471, %v1121
      %v1505 = vsel %vm1491, %v1472, %v1123
      %v1506 = vsel %vm1491, %v1473, %v1125
      %v1507 = vsel %vm1491, %v1474, %v1127
      %v1508 = vsel %vm1491, %v1475, %v1129
      %v1509 = vsel %vm1491, %v1476, %v1131
      %v1510 = vsel %vm1491, %v1477, %v1133
      %v1511 = vsel %vm1491, %v1478, %v1135
      %v1512 = vsel %vm1491, %v1479, %v1137
      %v1513 = vsel %vm1491, %v1480, %v1139
      %v1514 = vsel %vm1491, %v1481, %v1141
      %v1515 = vsel %vm1491, %v1482, %v1143
      %v1516 = vsel %vm1491, %v1483, %v1145
      %v1517 = vsel %vm1491, %v1484, %v1147
      %v1518 = vsel %vm1491, %v1485, %v1149
      %v1519 = vsel %vm1491, %v1486, %v1151
      %v1520 = vsel %vm1491, %v1487, %v1153
      %v1521 = vsel %vm1491, %v1488, %v1155
      %v1522 = vsel %vm1491, %v1489, %v1157
      %v1523 = vsel %vm1491, %v1490, %v1159
      %vm1524 = vcmask 261120
      %v1525 = vsel %vm1524, %v1492, %v1198
      %v1526 = vsel %vm1524, %v1493, %v1200
      %v1527 = vsel %vm1524, %v1494, %v1202
      %v1528 = vsel %vm1524, %v1495, %v1204
      %v1529 = vsel %vm1524, %v1496, %v1206
      %v1530 = vsel %vm1524, %v1497, %v1208
      %v1531 = vsel %vm1524, %v1498, %v1210
      %v1532 = vsel %vm1524, %v1499, %v1212
      %v1533 = vsel %vm1524, %v1500, %v1214
      %v1534 = vsel %vm1524, %v1501, %v1216
      %v1535 = vsel %vm1524, %v1502, %v1218
      %v1536 = vsel %vm1524, %v1503, %v1220
      %v1537 = vsel %vm1524, %v1504, %v1222
      %v1538 = vsel %vm1524, %v1505, %v1224
      %v1539 = vsel %vm1524, %v1506, %v1226
      %v1540 = vsel %vm1524, %v1507, %v1228
      %v1541 = vsel %vm1524, %v1508, %v1230
      %v1542 = vsel %vm1524, %v1509, %v1232
      %v1543 = vsel %vm1524, %v1510, %v1234
      %v1544 = vsel %vm1524, %v1511, %v1236
      %v1545 = vsel %vm1524, %v1512, %v1238
      %v1546 = vsel %vm1524, %v1513, %v1240
      %v1547 = vsel %vm1524, %v1514, %v1242
      %v1548 = vsel %vm1524, %v1515, %v1244
      %v1549 = vsel %vm1524, %v1516, %v1246
      %v1550 = vsel %vm1524, %v1517, %v1248
      %v1551 = vsel %vm1524, %v1518, %v1250
      %v1552 = vsel %vm1524, %v1519, %v1252
      %v1553 = vsel %vm1524, %v1520, %v1254
      %v1554 = vsel %vm1524, %v1521, %v1256
      %v1555 = vsel %vm1524, %v1522, %v1258
      %v1556 = vsel %vm1524, %v1523, %v1260
      %v1557 = vld [vmem:[%s1] sm:$0xff]
      %v1558 = vld [vmem:[%s1 + $0x8] sm:$0xff]
      %v1559 = vld [vmem:[%s1 + $0x10] sm:$0xff]
      %v1560 = vld [vmem:[%s1 + $0x18] sm:$0xff]
      %v1561 = vld [vmem:[%s1 + $0x20] sm:$0xf]
      %v1562 = vld [vmem:[%s2] sm:$0x1]
      %v1564 = vlaneseq
      %v1565 = vshrl.u32 %v1564, 7
      %v1566 = vsub.s32 0, %v1565
      %v1567 = vrot.slane %v1562, %v1566
      %vm1569 = vcmask 293888
      %v1571 = vsel %vm1569, %v1525, 0
      %v1574 = vsel %vm1569, %v1526, 0
      %v1577 = vsel %vm1569, %v1527, 0
      %v1580 = vsel %vm1569, %v1528, 0
      %v1583 = vsel %vm1569, %v1529, 0
      %v1586 = vsel %vm1569, %v1530, 0
      %v1589 = vsel %vm1569, %v1531, 0
      %v1592 = vsel %vm1569, %v1532, 0
      %v1595 = vsel %vm1569, %v1533, 0
      %v1598 = vsel %vm1569, %v1534, 0
      %v1601 = vsel %vm1569, %v1535, 0
      %v1604 = vsel %vm1569, %v1536, 0
      %v1607 = vsel %vm1569, %v1537, 0
      %v1610 = vsel %vm1569, %v1538, 0
      %v1613 = vsel %vm1569, %v1539, 0
      %v1616 = vsel %vm1569, %v1540, 0
      %v1619 = vsel %vm1569, %v1541, 0
      %v1622 = vsel %vm1569, %v1542, 0
      %v1625 = vsel %vm1569, %v1543, 0
      %v1628 = vsel %vm1569, %v1544, 0
      %v1631 = vsel %vm1569, %v1545, 0
      %v1634 = vsel %vm1569, %v1546, 0
      %v1637 = vsel %vm1569, %v1547, 0
      %v1640 = vsel %vm1569, %v1548, 0
      %v1643 = vsel %vm1569, %v1549, 0
      %v1646 = vsel %vm1569, %v1550, 0
      %v1649 = vsel %vm1569, %v1551, 0
      %v1652 = vsel %vm1569, %v1552, 0
      %v1655 = vsel %vm1569, %v1553, 0
      %v1658 = vsel %vm1569, %v1554, 0
      %v1661 = vsel %vm1569, %v1555, 0
      %v1664 = vsel %vm1569, %v1556, 0
      %vm1666 = vcmask 1043456
      %v1668 = vsel %vm1666, %v1561, 0
      %1670 = vmatprep.subr.mxu0 0.0
      %1671 = vmatpush1.msra.mxu0 0.0
      %1672 = vmatprep.subr.mxu0 0.0
      %1673 = vmatpush1.msra.mxu0 0.0
      %1674 = vmatprep.subr.mxu0 0.0
      %1675 = vmatpush1.msra.mxu0 0.0
      %1676 = vmatprep.subr.mxu0 0.0
      %1677 = vmatpush1.msra.mxu0 0.0
      %1678 = vmatprep.subr.mxu0 0.0
      %1679 = vmatpush1.msra.mxu0 0.0
      %1680 = vmatprep.subr.mxu0 0.0
      %1681 = vmatpush1.msra.mxu0 0.0
      %1682 = vmatprep.subr.mxu0 0.0
      %1683 = vmatpush1.msra.mxu0 0.0
      %1684 = vmatprep.subr.mxu0 0.0
      %1685 = vmatpush1.msra.mxu0 0.0
      %1686 = vmatprep.subr.mxu0 0.0
      %1687 = vmatpush1.msra.mxu0 0.0
      %1688 = vmatprep.subr.mxu0 0.0
      %1689 = vmatpush1.msra.mxu0 0.0
      %1690 = vmatprep.subr.mxu0 0.0
      %1691 = vmatpush1.msra.mxu0 0.0
      %1692 = vmatprep.subr.mxu0 0.0
      %1693 = vmatpush1.msra.mxu0 %v1668
      %1694 = vmatprep.subr.mxu0 0.0
      %1695 = vmatpush1.msra.mxu0 %v1560
      %1696 = vmatprep.subr.mxu0 0.0
      %1697 = vmatpush1.msra.mxu0 %v1559
      %1698 = vmatprep.subr.mxu0 0.0
      %1699 = vmatpush1.msra.mxu0 %v1558
      %1700 = vmatprep.subr.mxu0 0.0
      %1701 = vmatpush1.msra.mxu0 %v1557
      %1702 = vmatprep.subr.mxu0 0.0
      %1703 = vmatpush2.msra.mxu0 0.0
      %1704 = vmatprep.subr.mxu0 0.0
      %1705 = vmatpush2.msra.mxu0 0.0
      %1706 = vmatprep.subr.mxu0 0.0
      %1707 = vmatpush2.msra.mxu0 0.0
      %1708 = vmatprep.subr.mxu0 0.0
      %1709 = vmatpush2.msra.mxu0 0.0
      %1710 = vmatprep.subr.mxu0 0.0
      %1711 = vmatpush2.msra.mxu0 0.0
      %1712 = vmatprep.subr.mxu0 0.0
      %1713 = vmatpush2.msra.mxu0 0.0
      %1714 = vmatprep.subr.mxu0 0.0
      %1715 = vmatpush2.msra.mxu0 0.0
      %1716 = vmatprep.subr.mxu0 0.0
      %1717 = vmatpush2.msra.mxu0 0.0
      %1718 = vmatprep.subr.mxu0 0.0
      %1719 = vmatpush2.msra.mxu0 0.0
      %1720 = vmatprep.subr.mxu0 0.0
      %1721 = vmatpush2.msra.mxu0 0.0
      %1722 = vmatprep.subr.mxu0 0.0
      %1723 = vmatpush2.msra.mxu0 0.0
      %1724 = vmatprep.subr.mxu0 0.0
      %1725 = vmatpush2.msra.mxu0 0.0
      %1726 = vmatprep.subr.mxu0 0.0
      %1727 = vmatpush2.msra.mxu0 0.0
      %1728 = vmatprep.subr.mxu0 0.0
      %1729 = vmatpush2.msra.mxu0 0.0
      %1730 = vmatprep.subr.mxu0 0.0
      %1731 = vmatpush2.msra.mxu0 0.0
      %1732 = vmatprep.subr.mxu0 0.0
      %1733 = vmatpush2.msra.mxu0 0.0
      %1734 = vmatprep.mubr.f32.mxu0 0.0
      %1735 = vmatmul.mubr.f32.gmra.mxu0 %v1571
      %v1736 = vpop.f32.mrf.mxu0
      %v1737 = vadd.f32 %v1567, %v1736
      %v1738 = vpop.f32.mrf.mxu0
      %1739 = vmatprep.mubr.f32.mxu0 0.0
      %1740 = vmatmul.mubr.f32.gmra.mxu0 %v1574
      %v1741 = vpop.f32.mrf.mxu0
      %v1742 = vadd.f32 %v1567, %v1741
      %v1743 = vpop.f32.mrf.mxu0
      %1744 = vmatprep.mubr.f32.mxu0 0.0
      %1745 = vmatmul.mubr.f32.gmra.mxu0 %v1577
      %v1746 = vpop.f32.mrf.mxu0
      %v1747 = vadd.f32 %v1567, %v1746
      %v1748 = vpop.f32.mrf.mxu0
      %1749 = vmatprep.mubr.f32.mxu0 0.0
      %1750 = vmatmul.mubr.f32.gmra.mxu0 %v1580
      %v1751 = vpop.f32.mrf.mxu0
      %v1752 = vadd.f32 %v1567, %v1751
      %v1753 = vpop.f32.mrf.mxu0
      %1754 = vmatprep.mubr.f32.mxu0 0.0
      %1755 = vmatmul.mubr.f32.gmra.mxu0 %v1583
      %v1756 = vpop.f32.mrf.mxu0
      %v1757 = vadd.f32 %v1567, %v1756
      %v1758 = vpop.f32.mrf.mxu0
      %1759 = vmatprep.mubr.f32.mxu0 0.0
      %1760 = vmatmul.mubr.f32.gmra.mxu0 %v1586
      %v1761 = vpop.f32.mrf.mxu0
      %v1762 = vadd.f32 %v1567, %v1761
      %v1763 = vpop.f32.mrf.mxu0
      %1764 = vmatprep.mubr.f32.mxu0 0.0
      %1765 = vmatmul.mubr.f32.gmra.mxu0 %v1589
      %v1766 = vpop.f32.mrf.mxu0
      %v1767 = vadd.f32 %v1567, %v1766
      %v1768 = vpop.f32.mrf.mxu0
      %1769 = vmatprep.mubr.f32.mxu0 0.0
      %1770 = vmatmul.mubr.f32.gmra.mxu0 %v1592
      %v1771 = vpop.f32.mrf.mxu0
      %v1772 = vadd.f32 %v1567, %v1771
      %v1773 = vpop.f32.mrf.mxu0
      %1774 = vmatprep.mubr.f32.mxu0 0.0
      %1775 = vmatmul.mubr.f32.gmra.mxu0 %v1595
      %v1776 = vpop.f32.mrf.mxu0
      %v1777 = vadd.f32 %v1567, %v1776
      %v1778 = vpop.f32.mrf.mxu0
      %1779 = vmatprep.mubr.f32.mxu0 0.0
      %1780 = vmatmul.mubr.f32.gmra.mxu0 %v1598
      %v1781 = vpop.f32.mrf.mxu0
      %v1782 = vadd.f32 %v1567, %v1781
      %v1783 = vpop.f32.mrf.mxu0
      %1784 = vmatprep.mubr.f32.mxu0 0.0
      %1785 = vmatmul.mubr.f32.gmra.mxu0 %v1601
      %v1786 = vpop.f32.mrf.mxu0
      %v1787 = vadd.f32 %v1567, %v1786
      %v1788 = vpop.f32.mrf.mxu0
      %1789 = vmatprep.mubr.f32.mxu0 0.0
      %1790 = vmatmul.mubr.f32.gmra.mxu0 %v1604
      %v1791 = vpop.f32.mrf.mxu0
      %v1792 = vadd.f32 %v1567, %v1791
      %v1793 = vpop.f32.mrf.mxu0
      %1794 = vmatprep.mubr.f32.mxu0 0.0
      %1795 = vmatmul.mubr.f32.gmra.mxu0 %v1607
      %v1796 = vpop.f32.mrf.mxu0
      %v1797 = vadd.f32 %v1567, %v1796
      %v1798 = vpop.f32.mrf.mxu0
      %1799 = vmatprep.mubr.f32.mxu0 0.0
      %1800 = vmatmul.mubr.f32.gmra.mxu0 %v1610
      %v1801 = vpop.f32.mrf.mxu0
      %v1802 = vadd.f32 %v1567, %v1801
      %v1803 = vpop.f32.mrf.mxu0
      %1804 = vmatprep.mubr.f32.mxu0 0.0
      %1805 = vmatmul.mubr.f32.gmra.mxu0 %v1613
      %v1806 = vpop.f32.mrf.mxu0
      %v1807 = vadd.f32 %v1567, %v1806
      %v1808 = vpop.f32.mrf.mxu0
      %1809 = vmatprep.mubr.f32.mxu0 0.0
      %1810 = vmatmul.mubr.f32.gmra.mxu0 %v1616
      %v1811 = vpop.f32.mrf.mxu0
      %v1812 = vadd.f32 %v1567, %v1811
      %v1813 = vpop.f32.mrf.mxu0
      %1814 = vmatprep.mubr.f32.mxu0 0.0
      %1815 = vmatmul.mubr.f32.gmra.mxu0 %v1619
      %v1816 = vpop.f32.mrf.mxu0
      %v1817 = vadd.f32 %v1567, %v1816
      %v1818 = vpop.f32.mrf.mxu0
      %1819 = vmatprep.mubr.f32.mxu0 0.0
      %1820 = vmatmul.mubr.f32.gmra.mxu0 %v1622
      %v1821 = vpop.f32.mrf.mxu0
      %v1822 = vadd.f32 %v1567, %v1821
      %v1823 = vpop.f32.mrf.mxu0
      %1824 = vmatprep.mubr.f32.mxu0 0.0
      %1825 = vmatmul.mubr.f32.gmra.mxu0 %v1625
      %v1826 = vpop.f32.mrf.mxu0
      %v1827 = vadd.f32 %v1567, %v1826
      %v1828 = vpop.f32.mrf.mxu0
      %1829 = vmatprep.mubr.f32.mxu0 0.0
      %1830 = vmatmul.mubr.f32.gmra.mxu0 %v1628
      %v1831 = vpop.f32.mrf.mxu0
      %v1832 = vadd.f32 %v1567, %v1831
      %v1833 = vpop.f32.mrf.mxu0
      %1834 = vmatprep.mubr.f32.mxu0 0.0
      %1835 = vmatmul.mubr.f32.gmra.mxu0 %v1631
      %v1836 = vpop.f32.mrf.mxu0
      %v1837 = vadd.f32 %v1567, %v1836
      %v1838 = vpop.f32.mrf.mxu0
      %1839 = vmatprep.mubr.f32.mxu0 0.0
      %1840 = vmatmul.mubr.f32.gmra.mxu0 %v1634
      %v1841 = vpop.f32.mrf.mxu0
      %v1842 = vadd.f32 %v1567, %v1841
      %v1843 = vpop.f32.mrf.mxu0
      %1844 = vmatprep.mubr.f32.mxu0 0.0
      %1845 = vmatmul.mubr.f32.gmra.mxu0 %v1637
      %v1846 = vpop.f32.mrf.mxu0
      %v1847 = vadd.f32 %v1567, %v1846
      %v1848 = vpop.f32.mrf.mxu0
      %1849 = vmatprep.mubr.f32.mxu0 0.0
      %1850 = vmatmul.mubr.f32.gmra.mxu0 %v1640
      %v1851 = vpop.f32.mrf.mxu0
      %v1852 = vadd.f32 %v1567, %v1851
      %v1853 = vpop.f32.mrf.mxu0
      %1854 = vmatprep.mubr.f32.mxu0 0.0
      %1855 = vmatmul.mubr.f32.gmra.mxu0 %v1643
      %v1856 = vpop.f32.mrf.mxu0
      %v1857 = vadd.f32 %v1567, %v1856
      %v1858 = vpop.f32.mrf.mxu0
      %1859 = vmatprep.mubr.f32.mxu0 0.0
      %1860 = vmatmul.mubr.f32.gmra.mxu0 %v1646
      %v1861 = vpop.f32.mrf.mxu0
      %v1862 = vadd.f32 %v1567, %v1861
      %v1863 = vpop.f32.mrf.mxu0
      %1864 = vmatprep.mubr.f32.mxu0 0.0
      %1865 = vmatmul.mubr.f32.gmra.mxu0 %v1649
      %v1866 = vpop.f32.mrf.mxu0
      %v1867 = vadd.f32 %v1567, %v1866
      %v1868 = vpop.f32.mrf.mxu0
      %1869 = vmatprep.mubr.f32.mxu0 0.0
      %1870 = vmatmul.mubr.f32.gmra.mxu0 %v1652
      %v1871 = vpop.f32.mrf.mxu0
      %v1872 = vadd.f32 %v1567, %v1871
      %v1873 = vpop.f32.mrf.mxu0
      %1874 = vmatprep.mubr.f32.mxu0 0.0
      %1875 = vmatmul.mubr.f32.gmra.mxu0 %v1655
      %v1876 = vpop.f32.mrf.mxu0
      %v1877 = vadd.f32 %v1567, %v1876
      %v1878 = vpop.f32.mrf.mxu0
      %1879 = vmatprep.mubr.f32.mxu0 0.0
      %1880 = vmatmul.mubr.f32.gmra.mxu0 %v1658
      %v1881 = vpop.f32.mrf.mxu0
      %v1882 = vadd.f32 %v1567, %v1881
      %v1883 = vpop.f32.mrf.mxu0
      %1884 = vmatprep.mubr.f32.mxu0 0.0
      %1885 = vmatmul.mubr.f32.gmra.mxu0 %v1661
      %v1886 = vpop.f32.mrf.mxu0
      %v1887 = vadd.f32 %v1567, %v1886
      %v1888 = vpop.f32.mrf.mxu0
      %1889 = vmatprep.mubr.f32.mxu0 0.0
      %1890 = vmatmul.mubr.f32.gmra.mxu0 %v1664
      %v1891 = vpop.f32.mrf.mxu0
      %v1892 = vadd.f32 %v1567, %v1891
      %v1893 = vpop.f32.mrf.mxu0
      %1894 = vdwg.mxu0
      %1895 = vst [vmem:[%s226] sm:$0xff] %v1737
      %1896 = vst [vmem:[%s226 + $0x8] sm:$0xff] %v1742
      %1897 = vst [vmem:[%s226 + $0x10] sm:$0xff] %v1747
      %1898 = vst [vmem:[%s226 + $0x18] sm:$0xff] %v1752
      %1899 = vst [vmem:[%s226 + $0x20] sm:$0xff] %v1757
      %1900 = vst [vmem:[%s226 + $0x28] sm:$0xff] %v1762
      %1901 = vst [vmem:[%s226 + $0x30] sm:$0xff] %v1767
      %1902 = vst [vmem:[%s226 + $0x38] sm:$0xff] %v1772
      %1903 = vst [vmem:[%s226 + $0x40] sm:$0xff] %v1777
      %1904 = vst [vmem:[%s226 + $0x48] sm:$0xff] %v1782
      %1905 = vst [vmem:[%s226 + $0x50] sm:$0xff] %v1787
      %1906 = vst [vmem:[%s226 + $0x58] sm:$0xff] %v1792
      %1907 = vst [vmem:[%s226 + $0x60] sm:$0xff] %v1797
      %1908 = vst [vmem:[%s226 + $0x68] sm:$0xff] %v1802
      %1909 = vst [vmem:[%s226 + $0x70] sm:$0xff] %v1807
      %1910 = vst [vmem:[%s226 + $0x78] sm:$0xff] %v1812
      %1911 = vst [vmem:[%s226 + $0x80] sm:$0xff] %v1817
      %1912 = vst [vmem:[%s226 + $0x88] sm:$0xff] %v1822
      %1913 = vst [vmem:[%s226 + $0x90] sm:$0xff] %v1827
      %1914 = vst [vmem:[%s226 + $0x98] sm:$0xff] %v1832
      %1915 = vst [vmem:[%s226 + $0xa0] sm:$0xff] %v1837
      %1916 = vst [vmem:[%s226 + $0xa8] sm:$0xff] %v1842
      %1917 = vst [vmem:[%s226 + $0xb0] sm:$0xff] %v1847
      %1918 = vst [vmem:[%s226 + $0xb8] sm:$0xff] %v1852
      %1919 = vst [vmem:[%s226 + $0xc0] sm:$0xff] %v1857
      %1920 = vst [vmem:[%s226 + $0xc8] sm:$0xff] %v1862
      %1921 = vst [vmem:[%s226 + $0xd0] sm:$0xff] %v1867
      %1922 = vst [vmem:[%s226 + $0xd8] sm:$0xff] %v1872
      %1923 = vst [vmem:[%s226 + $0xe0] sm:$0xff] %v1877
      %1924 = vst [vmem:[%s226 + $0xe8] sm:$0xff] %v1882
      %1925 = vst [vmem:[%s226 + $0xf0] sm:$0xff] %v1887
      %1926 = vst [vmem:[%s226 + $0xf8] sm:$0xff] %v1892
      %p1927 = scmp.eq.s32.totalorder %s21, 0
      // Predicated region
      $region33: #{conv2d_batchnorm_relu.2} parent=31 // pred_check
        %p1928 = pneg %p1927
      $region34: #{conv2d_batchnorm_relu.2} parent=31 // pred_check_branch
        %1930 = sbr.rel (%p1928) target = $region36
      $region35: #{conv2d_batchnorm_relu.2} parent=31 // pred_region
        %1931 = vst [vmem:[%s231] sm:$0x3] 0.0
      $region36: #{conv2d_batchnorm_relu.2} parent=31 // pred_fallthru
        _
      %v1932 = vadd.f32 %v1737, %v1742
      %v1933 = vadd.f32 %v1932, %v1747
      %v1934 = vadd.f32 %v1933, %v1752
      %v1935 = vadd.f32 %v1934, %v1757
      %v1936 = vadd.f32 %v1935, %v1762
      %v1937 = vadd.f32 %v1936, %v1767
      %v1938 = vadd.f32 %v1937, %v1772
      %v1939 = vadd.f32 %v1938, %v1777
      %v1940 = vadd.f32 %v1939, %v1782
      %v1941 = vadd.f32 %v1940, %v1787
      %v1942 = vadd.f32 %v1941, %v1792
      %v1943 = vadd.f32 %v1942, %v1797
      %v1944 = vadd.f32 %v1943, %v1802
      %v1945 = vadd.f32 %v1944, %v1807
      %v1946 = vadd.f32 %v1945, %v1812
      %v1947 = vadd.f32 %v1946, %v1817
      %v1948 = vadd.f32 %v1947, %v1822
      %v1949 = vadd.f32 %v1948, %v1827
      %v1950 = vadd.f32 %v1949, %v1832
      %v1951 = vadd.f32 %v1950, %v1837
      %v1952 = vadd.f32 %v1951, %v1842
      %v1953 = vadd.f32 %v1952, %v1847
      %v1954 = vadd.f32 %v1953, %v1852
      %v1955 = vadd.f32 %v1954, %v1857
      %v1956 = vadd.f32 %v1955, %v1862
      %v1957 = vadd.f32 %v1956, %v1867
      %v1958 = vadd.f32 %v1957, %v1872
      %v1959 = vadd.f32 %v1958, %v1877
      %v1960 = vadd.f32 %v1959, %v1882
      %v1961 = vadd.f32 %v1960, %v1887
      %v1962 = vadd.f32 %v1961, %v1892
      %v1963 = vrot.slane %v1962, 4
      %v1964 = vadd.f32 %v1962, %v1963
      %v1965 = vrot.slane %v1964, 2
      %v1966 = vadd.f32 %v1964, %v1965
      %v1967 = vrot.slane %v1966, 1
      %v1968 = vadd.f32 %v1966, %v1967
      %v1969 = vmul.f32 %v1737, %v1737
      %v1970 = vmul.f32 %v1742, %v1742
      %v1971 = vmul.f32 %v1747, %v1747
      %v1972 = vmul.f32 %v1752, %v1752
      %v1973 = vmul.f32 %v1757, %v1757
      %v1974 = vmul.f32 %v1762, %v1762
      %v1975 = vmul.f32 %v1767, %v1767
      %v1976 = vmul.f32 %v1772, %v1772
      %v1977 = vmul.f32 %v1777, %v1777
      %v1978 = vmul.f32 %v1782, %v1782
      %v1979 = vmul.f32 %v1787, %v1787
      %v1980 = vmul.f32 %v1792, %v1792
      %v1981 = vmul.f32 %v1797, %v1797
      %v1982 = vmul.f32 %v1802, %v1802
      %v1983 = vmul.f32 %v1807, %v1807
      %v1984 = vmul.f32 %v1812, %v1812
      %v1985 = vmul.f32 %v1817, %v1817
      %v1986 = vmul.f32 %v1822, %v1822
      %v1987 = vmul.f32 %v1827, %v1827
      %v1988 = vmul.f32 %v1832, %v1832
      %v1989 = vmul.f32 %v1837, %v1837
      %v1990 = vmul.f32 %v1842, %v1842
      %v1991 = vmul.f32 %v1847, %v1847
      %v1992 = vmul.f32 %v1852, %v1852
      %v1993 = vmul.f32 %v1857, %v1857
      %v1994 = vmul.f32 %v1862, %v1862
      %v1995 = vmul.f32 %v1867, %v1867
      %v1996 = vmul.f32 %v1872, %v1872
      %v1997 = vmul.f32 %v1877, %v1877
      %v1998 = vmul.f32 %v1882, %v1882
      %v1999 = vmul.f32 %v1887, %v1887
      %v2000 = vmul.f32 %v1892, %v1892
      %v2001 = vadd.f32 %v1969, %v1970
      %v2002 = vadd.f32 %v2001, %v1971
      %v2003 = vadd.f32 %v2002, %v1972
      %v2004 = vadd.f32 %v2003, %v1973
      %v2005 = vadd.f32 %v2004, %v1974
      %v2006 = vadd.f32 %v2005, %v1975
      %v2007 = vadd.f32 %v2006, %v1976
      %v2008 = vadd.f32 %v2007, %v1977
      %v2009 = vadd.f32 %v2008, %v1978
      %v2010 = vadd.f32 %v2009, %v1979
      %v2011 = vadd.f32 %v2010, %v1980
      %v2012 = vadd.f32 %v2011, %v1981
      %v2013 = vadd.f32 %v2012, %v1982
      %v2014 = vadd.f32 %v2013, %v1983
      %v2015 = vadd.f32 %v2014, %v1984
      %v2016 = vadd.f32 %v2015, %v1985
      %v2017 = vadd.f32 %v2016, %v1986
      %v2018 = vadd.f32 %v2017, %v1987
      %v2019 = vadd.f32 %v2018, %v1988
      %v2020 = vadd.f32 %v2019, %v1989
      %v2021 = vadd.f32 %v2020, %v1990
      %v2022 = vadd.f32 %v2021, %v1991
      %v2023 = vadd.f32 %v2022, %v1992
      %v2024 = vadd.f32 %v2023, %v1993
      %v2025 = vadd.f32 %v2024, %v1994
      %v2026 = vadd.f32 %v2025, %v1995
      %v2027 = vadd.f32 %v2026, %v1996
      %v2028 = vadd.f32 %v2027, %v1997
      %v2029 = vadd.f32 %v2028, %v1998
      %v2030 = vadd.f32 %v2029, %v1999
      %v2031 = vadd.f32 %v2030, %v2000
      %v2032 = vrot.slane %v2031, 4
      %v2033 = vadd.f32 %v2031, %v2032
      %v2034 = vrot.slane %v2033, 2
      %v2035 = vadd.f32 %v2033, %v2034
      %v2036 = vrot.slane %v2035, 1
      %v2037 = vadd.f32 %v2035, %v2036
      %v2038 = vld [vmem:[%s231] sm:$0x3]
      %vm2039 = vcmask 1040384
      %v2040 = vsel %vm2039, %v1968, %v2037
      %v2041 = vadd.f32 %v2038, %v2040
      %2042 = vst [vmem:[%s231] sm:$0x3] %v2041
      %s2043 = smul.u32 32, %s21
      %p2044 = scmp.lt.s32.totalorder %s20, 1
      %s2045 = scalar_select %p2044, %s20, 1
      %p2046 = scmp.lt.s32.totalorder %s2043, 31
      %s2047 = scalar_select %p2046, %s2043, 31
      %s2048 = smul.addr %s2045, 32
      %s2049 = sadd.s32 %s2047, %s2048
      %s2050 = smul.addr %s2049, 8
      %s2051 = scalar_lea.vmem %s3, %s2050
      %p2052 = scmp.lt.s32.totalorder %s20, 1
      %s2053 = scalar_select %p2052, %s20, 1
      %s2054 = smul.addr %s2053, 2
      %s2055 = scalar_lea.vmem %s4, %s2054
      // Predicated region
      $region37: #{conv2d_batchnorm_relu.2} parent=31 // pred_check
        %p2056 = pneg %p116
      $region38: #{conv2d_batchnorm_relu.2} parent=31 // pred_check_branch
        %2058 = sbr.rel (%p2056) target = $region40
      $region39: #{conv2d_batchnorm_relu.2} parent=31 // pred_region
        %s2059 = smul.u32 32, %s21
      $region40: #{conv2d_batchnorm_relu.2} parent=31 // pred_fallthru
        _
      // Predicated region
      $region41: #{conv2d_batchnorm_relu.2} parent=31 // pred_check
        %p2060 = pneg %p142
      $region42: #{conv2d_batchnorm_relu.2} parent=31 // pred_check_branch
        %2062 = sbr.rel (%p2060) target = $region44
      $region43: #{conv2d_batchnorm_relu.2} parent=31 // pred_region
        _
      $region44: #{conv2d_batchnorm_relu.2} parent=31 // pred_fallthru
        _
    $region32: #{conv2d_batchnorm_relu.2} parent=5 // pred_fallthru
      _
    %p2063 = scmp.le.s32.totalorder 2, %s11
    // Predicated region
    $region45: #{conv2d_batchnorm_relu.2} parent=5 // pred_check
      %p2064 = pneg %p2063
    $region46: #{conv2d_batchnorm_relu.2} parent=5 // pred_check_branch
      %2066 = sbr.rel (%p2064) target = $region48
    $region47: #{conv2d_batchnorm_relu.2} parent=5 // pred_region
      %s2067 = ssub.s32 %s11, 2
      // Predicated region
      $region49: #{conv2d_batchnorm_relu.2} parent=47 // pred_check
        %p2068 = pneg %p122
      $region50: #{conv2d_batchnorm_relu.2} parent=47 // pred_check_branch
        %2070 = sbr.rel (%p2068) target = $region52
      $region51: #{conv2d_batchnorm_relu.2} parent=47 // pred_region
        %s2071 = smul.u32 32, %s23
        %p2072 = scmp.lt.s32.totalorder %s22, 1
        %s2073 = scalar_select %p2072, %s22, 1
        %p2074 = scmp.lt.s32.totalorder %s2071, 31
        %s2075 = scalar_select %p2074, %s2071, 31
        %s2076 = smul.addr %s2073, 32
        %s2077 = sadd.s32 %s2075, %s2076
        %s2078 = smul.addr %s2077, 8
        %s2079 = scalar_lea.vmem %s3, %s2078
      $region52: #{conv2d_batchnorm_relu.2} parent=47 // pred_fallthru
        _
      // Predicated region
      $region53: #{conv2d_batchnorm_relu.2} parent=47 // pred_check
        %p2080 = pneg %p148
      $region54: #{conv2d_batchnorm_relu.2} parent=47 // pred_check_branch
        %2082 = sbr.rel (%p2080) target = $region56
      $region55: #{conv2d_batchnorm_relu.2} parent=47 // pred_region
        %p2083 = scmp.lt.s32.totalorder %s22, 1
        %s2084 = scalar_select %p2083, %s22, 1
        %s2085 = smul.addr %s2084, 2
        %s2086 = scalar_lea.vmem %s4, %s2085
      $region56: #{conv2d_batchnorm_relu.2} parent=47 // pred_fallthru
        _
    $region48: #{conv2d_batchnorm_relu.2} parent=5 // pred_fallthru
      _
  $region6: #{conv2d_batchnorm_relu.2} parent=0 // loop_footer
    %s15 = sadd.s32 1, %s11
  $region7: #{conv2d_batchnorm_relu.2} parent=0 // loop_footer_branch
    %10 = sbr.rel target = $region3
  $region8: #{conv2d_batchnorm_relu.2} parent=0 // loop_exit
    _

</llo_original>
